<compile_context>
chip_gen: v5e
topology: v5e:2x2
jax: 0.10.0
libtpu: 0.0.40
codegen_flags: <defaults>
</compile_context>

<pallas_src>
import math

import jax
import jax.numpy as jnp
from jax.experimental import pallas as pl
from jax.experimental.pallas import tpu as pltpu


HIDDEN = 384          # per-branch hidden width (spec)
TB_MAX = 512          # batch-tile rows (multiple of 256; VMEM-safe on v7x)


def _round_up(x, m):
    return (x + m - 1) // m * m


def critic_kernel(sa_ref, w14_ref, b14_ref, w2_ref, b2_ref, w5_ref, b5_ref,
                  w3_ref, w6_ref, b36_ref, out_ref):
    # ---- Layer 1: fused (fc1 | fc4), one f32 MXU pass (K is tiny). ----
    h = jnp.dot(sa_ref[...], w14_ref[...], preferred_element_type=jnp.float32)
    h = jnp.maximum(h + b14_ref[...], 0.0)                    # (TB, 2H) f32

    # ---- Layer 2: two independent (H, H) bf16 matmuls, f32 accumulation. ----
    hb = h.astype(jnp.bfloat16)
    h1 = jnp.dot(hb[:, :HIDDEN], w2_ref[...],
                 preferred_element_type=jnp.float32)
    h1 = jnp.maximum(h1 + b2_ref[...], 0.0)                   # (TB, H) f32
    h2 = jnp.dot(hb[:, HIDDEN:], w5_ref[...],
                 preferred_element_type=jnp.float32)
    h2 = jnp.maximum(h2 + b5_ref[...], 0.0)                   # (TB, H) f32

    # ---- Layer 3: width-1 heads on the VPU/XLU (no zero-padded MXU head). ----
    q1 = jnp.sum(h1 * w3_ref[...], axis=-1, keepdims=True)    # (TB, 1)
    q2 = jnp.sum(h2 * w6_ref[...], axis=-1, keepdims=True)    # (TB, 1)
    q = jnp.concatenate([q1, q2], axis=-1) + b36_ref[...]     # (TB, 2)
    out_ref[...] = q.astype(out_ref.dtype)


def make_critic_params(state_size, action_size, hidden=HIDDEN, seed=0):
    """Per-layer PyTorch-style init: U(-1/sqrt(fan_in), 1/sqrt(fan_in))."""
    key = jax.random.PRNGKey(seed)
    in_dim = state_size + action_size
    dims = [(in_dim, hidden), (hidden, hidden), (hidden, 1),
            (in_dim, hidden), (hidden, hidden), (hidden, 1)]
    raw = []
    for fan_in, fan_out in dims:
        key, kw, kb = jax.random.split(key, 3)
        bound = 1.0 / math.sqrt(fan_in)
        w = jax.random.uniform(kw, (fan_in, fan_out), jnp.float32, -bound, bound)
        b = jax.random.uniform(kb, (fan_out,), jnp.float32, -bound, bound)
        raw.append((w, b))
    return raw


def pack_critic_params(raw, wdtype=jnp.bfloat16):
    """Pack the twin branches' weights into the kernel's layout."""
    (w1, b1), (w2, b2), (w3, b3), (w4, b4), (w5, b5), (w6, b6) = raw
    in_dim = w1.shape[0]
    k_pad = _round_up(in_dim, 8)

    # Layer 1: fuse fc1|fc4 along the output axis; zero-pad K to a multiple of 8.
    w14 = jnp.concatenate([w1, w4], axis=1)                    # (in, 2H) f32
    if k_pad != in_dim:
        w14 = jnp.concatenate(
            [w14, jnp.zeros((k_pad - in_dim, w14.shape[1]), jnp.float32)],
            axis=0)
    b14 = jnp.concatenate([b1, b4])[None, :]                   # (1, 2H)

    return dict(
        in_dim=in_dim,
        w14=w14.astype(jnp.float32),          # layer 1 kept f32 (accuracy)
        b14=b14.astype(jnp.float32),
        w2=w2.astype(wdtype), b2=b2[None, :].astype(jnp.float32),
        w5=w5.astype(wdtype), b5=b5[None, :].astype(jnp.float32),
        w3r=w3.T.astype(jnp.float32),         # (1, H) head row for branch 1
        w6r=w6.T.astype(jnp.float32),         # (1, H) head row for branch 2
        b36=jnp.concatenate([b3, b6])[None, :].astype(jnp.float32),   # (1, 2)
    )


def critic_forward(state, action, packed):
    """Returns (q1, q2), each (B, 1) float32."""
    B = state.shape[0]
    in_dim = packed["in_dim"]
    K = packed["w14"].shape[0]
    H = HIDDEN

    # Concatenate state||action once (and zero-pad K to the packed width).
    parts = [state.astype(jnp.float32), action.astype(jnp.float32)]
    if K != in_dim:
        parts.append(jnp.zeros((B, K - in_dim), jnp.float32))
    sa = jnp.concatenate(parts, axis=1)                        # (B, K)

    # Batch tiling: full tiles only (pre-pad B); axis is megacore-parallel.
    if B >= TB_MAX:
        tb = TB_MAX
    else:
        tb = max(8, _round_up(B, 8))
    bp = _round_up(B, tb)
    if bp != B:
        sa = jnp.concatenate([sa, jnp.zeros((bp - B, K), jnp.float32)], axis=0)

    resident = lambda i: (0, 0)        # weights/biases: same block every step

    out = pl.pallas_call(
        critic_kernel,
        out_shape=jax.ShapeDtypeStruct((bp, 2), jnp.float32),
        grid=(bp // tb,),
        in_specs=[
            pl.BlockSpec((tb, K), lambda i: (i, 0)),           # sa (row-tiled)
            pl.BlockSpec((K, 2 * H), resident),                # w14
            pl.BlockSpec((1, 2 * H), resident),                # b14
            pl.BlockSpec((H, H), resident),                    # w2
            pl.BlockSpec((1, H), resident),                    # b2
            pl.BlockSpec((H, H), resident),                    # w5
            pl.BlockSpec((1, H), resident),                    # b5
            pl.BlockSpec((1, H), resident),                    # w3 row
            pl.BlockSpec((1, H), resident),                    # w6 row
            pl.BlockSpec((1, 2), resident),                    # [b3, b6]
        ],
        out_specs=pl.BlockSpec((tb, 2), lambda i: (i, 0)),
        compiler_params=pltpu.CompilerParams(
            dimension_semantics=("parallel",),
            vmem_limit_bytes=32 * 1024 * 1024),
    )(sa, packed["w14"], packed["b14"], packed["w2"], packed["b2"],
      packed["w5"], packed["b5"], packed["w3r"], packed["w6r"], packed["b36"])

    return out[:B, 0:1], out[:B, 1:2]


def critic_reference_mirrored(state, action, packed):
    """Pure-JAX reference mirroring the kernel's bf16 rounding points."""
    f32 = jnp.float32
    B = state.shape[0]
    in_dim = packed["in_dim"]
    K = packed["w14"].shape[0]
    parts = [state.astype(f32), action.astype(f32)]
    if K != in_dim:
        parts.append(jnp.zeros((B, K - in_dim), f32))
    sa = jnp.concatenate(parts, axis=1)
    h = jax.nn.relu(sa @ packed["w14"] + packed["b14"])
    hb = h.astype(jnp.bfloat16).astype(f32)
    h1 = jax.nn.relu(hb[:, :HIDDEN] @ packed["w2"].astype(f32) + packed["b2"])
    h2 = jax.nn.relu(hb[:, HIDDEN:] @ packed["w5"].astype(f32) + packed["b5"])
    q1 = jnp.sum(h1 * packed["w3r"], axis=-1, keepdims=True)
    q2 = jnp.sum(h2 * packed["w6r"], axis=-1, keepdims=True)
    q = jnp.concatenate([q1, q2], axis=-1) + packed["b36"]
    return q[:, 0:1], q[:, 1:2]


def critic_reference_f32(state, action, raw):
    """Pure-f32 reference matching the original PyTorch module exactly."""
    (w1, b1), (w2, b2), (w3, b3), (w4, b4), (w5, b5), (w6, b6) = raw
    sa = jnp.concatenate([state, action], axis=1).astype(jnp.float32)
    h1 = jax.nn.relu(sa @ w1 + b1)
    h1 = jax.nn.relu(h1 @ w2 + b2)
    q1 = h1 @ w3 + b3
    h2 = jax.nn.relu(sa @ w4 + b4)
    h2 = jax.nn.relu(h2 @ w5 + b5)
    q2 = h2 @ w6 + b6
    return q1, q2


if __name__ == "__main__":
    state_size, action_size, batch = 16, 4, 8

    key = jax.random.PRNGKey(0)
    ks, ka, ks2, ka2 = jax.random.split(key, 4)
    state = jax.random.normal(ks, (batch, state_size), jnp.float32)
    action = jax.random.normal(ka, (batch, action_size), jnp.float32)

    raw_params = make_critic_params(state_size, action_size, seed=0)
    packed = pack_critic_params(raw_params)

    # Small batch: single tile, exercises the B < TB path.
    q1, q2 = critic_forward(state, action, packed)
    jax.block_until_ready((q1, q2))
    assert q1.shape == (batch, 1) and q2.shape == (batch, 1)

    # Tight check vs. a reference that mirrors the kernel's bf16 rounding.
    r1, r2 = critic_reference_mirrored(state, action, packed)
    assert jnp.allclose(q1, r1, atol=2e-2, rtol=2e-2)
    assert jnp.allclose(q2, r2, atol=2e-2, rtol=2e-2)

    # Loose check vs. the original full-f32 module semantics (bf16 layer-2
    # weight/activation quantization error only; layer 1 is kept f32).
    f1, f2 = critic_reference_f32(state, action, raw_params)
    assert jnp.allclose(q1, f1, atol=1e-1, rtol=1e-1)
    assert jnp.allclose(q2, f2, atol=1e-1, rtol=1e-1)

    # Larger batch: exercises the batch grid + pre-padded tail tile.
    batch_l = 600
    state_l = jax.random.normal(ks2, (batch_l, state_size), jnp.float32)
    action_l = jax.random.normal(ka2, (batch_l, action_size), jnp.float32)
    q1l, q2l = critic_forward(state_l, action_l, packed)
    jax.block_until_ready((q1l, q2l))
    assert q1l.shape == (batch_l, 1) and q2l.shape == (batch_l, 1)

    r1l, r2l = critic_reference_mirrored(state_l, action_l, packed)
    assert jnp.allclose(q1l, r1l, atol=2e-2, rtol=2e-2)
    assert jnp.allclose(q2l, r2l, atol=2e-2, rtol=2e-2)
    f1l, f2l = critic_reference_f32(state_l, action_l, raw_params)
    assert jnp.allclose(q1l, f1l, atol=1e-1, rtol=1e-1)
    assert jnp.allclose(q2l, f2l, atol=1e-1, rtol=1e-1)

    print("KERNEL_OK")
</pallas_src>

<mosaic_0001>
module attributes {stable_mosaic.version = 11 : i64} {
  func.func @critic_kernel(%arg0: i32, %arg1: memref<8x24xf32, #tpu.memory_space<vmem>>, %arg2: memref<24x768xf32, #tpu.memory_space<vmem>>, %arg3: memref<1x768xf32, #tpu.memory_space<vmem>>, %arg4: memref<384x384xbf16, #tpu.memory_space<vmem>>, %arg5: memref<1x384xf32, #tpu.memory_space<vmem>>, %arg6: memref<384x384xbf16, #tpu.memory_space<vmem>>, %arg7: memref<1x384xf32, #tpu.memory_space<vmem>>, %arg8: memref<1x384xf32, #tpu.memory_space<vmem>>, %arg9: memref<1x384xf32, #tpu.memory_space<vmem>>, %arg10: memref<1x2xf32, #tpu.memory_space<vmem>>, %arg11: memref<8x2xf32, #tpu.memory_space<vmem>>) attributes {dimension_semantics = [#tpu.dimension_semantics<parallel>], iteration_bounds = array<i64: 1>, scalar_prefetch = 0 : i64, scratch_operands = 0 : i64, tpu.core_type = #tpu.core_type<tc>, window_params = [{transform_indices = @transform_0, window_bounds = array<i64: 8, 24>}, {pipeline_mode = #tpu.pipeline_mode<synchronous>, transform_indices = @transform_1, window_bounds = array<i64: 24, 768>}, {pipeline_mode = #tpu.pipeline_mode<synchronous>, transform_indices = @transform_2, window_bounds = array<i64: 1, 768>}, {pipeline_mode = #tpu.pipeline_mode<synchronous>, transform_indices = @transform_3, window_bounds = array<i64: 384, 384>}, {pipeline_mode = #tpu.pipeline_mode<synchronous>, transform_indices = @transform_4, window_bounds = array<i64: 1, 384>}, {pipeline_mode = #tpu.pipeline_mode<synchronous>, transform_indices = @transform_5, window_bounds = array<i64: 384, 384>}, {pipeline_mode = #tpu.pipeline_mode<synchronous>, transform_indices = @transform_6, window_bounds = array<i64: 1, 384>}, {pipeline_mode = #tpu.pipeline_mode<synchronous>, transform_indices = @transform_7, window_bounds = array<i64: 1, 384>}, {pipeline_mode = #tpu.pipeline_mode<synchronous>, transform_indices = @transform_8, window_bounds = array<i64: 1, 384>}, {pipeline_mode = #tpu.pipeline_mode<synchronous>, transform_indices = @transform_9, window_bounds = array<i64: 1, 2>}, {transform_indices = @transform_10, window_bounds = array<i64: 8, 2>}]} {
    %c0 = arith.constant 0 : index
    %c0_0 = arith.constant 0 : index
    %0 = vector.load %arg1[%c0, %c0_0] : memref<8x24xf32, #tpu.memory_space<vmem>>, vector<8x24xf32>
    %c0_1 = arith.constant 0 : index
    %c0_2 = arith.constant 0 : index
    %1 = vector.load %arg2[%c0_1, %c0_2] : memref<24x768xf32, #tpu.memory_space<vmem>>, vector<24x768xf32>
    %cst = arith.constant dense<0.000000e+00> : vector<8x768xf32>
    %2 = tpu.matmul %0, %1, %cst {dimension_numbers = #tpu.dot_dimension_numbers<[1], [0], [0], [1], [0, 0, 1, 1], [], []>} : vector<8x24xf32>, vector<24x768xf32>, vector<8x768xf32> -> vector<8x768xf32>
    %c0_3 = arith.constant 0 : index
    %c0_4 = arith.constant 0 : index
    %3 = vector.load %arg3[%c0_3, %c0_4] : memref<1x768xf32, #tpu.memory_space<vmem>>, vector<1x768xf32>
    %4 = vector.broadcast %3 : vector<1x768xf32> to vector<8x768xf32>
    %5 = arith.addf %2, %4 : vector<8x768xf32>
    %cst_5 = arith.constant 0.000000e+00 : f32
    %6 = vector.broadcast %cst_5 : f32 to vector<8x768xf32>
    %7 = arith.maximumf %5, %6 : vector<8x768xf32>
    %8 = arith.truncf %7 : vector<8x768xf32> to vector<8x768xbf16>
    %9 = vector.extract_strided_slice %8 {offsets = [0, 0], sizes = [8, 384], strides = [1, 1]} : vector<8x768xbf16> to vector<8x384xbf16>
    %c0_6 = arith.constant 0 : index
    %c0_7 = arith.constant 0 : index
    %10 = vector.load %arg4[%c0_6, %c0_7] : memref<384x384xbf16, #tpu.memory_space<vmem>>, vector<384x384xbf16>
    %cst_8 = arith.constant dense<0.000000e+00> : vector<8x384xf32>
    %11 = tpu.matmul %9, %10, %cst_8 {dimension_numbers = #tpu.dot_dimension_numbers<[1], [0], [0], [1], [0, 0, 1, 1], [], []>} : vector<8x384xbf16>, vector<384x384xbf16>, vector<8x384xf32> -> vector<8x384xf32>
    %c0_9 = arith.constant 0 : index
    %c0_10 = arith.constant 0 : index
    %12 = vector.load %arg5[%c0_9, %c0_10] : memref<1x384xf32, #tpu.memory_space<vmem>>, vector<1x384xf32>
    %13 = vector.broadcast %12 : vector<1x384xf32> to vector<8x384xf32>
    %14 = arith.addf %11, %13 : vector<8x384xf32>
    %cst_11 = arith.constant 0.000000e+00 : f32
    %15 = vector.broadcast %cst_11 : f32 to vector<8x384xf32>
    %16 = arith.maximumf %14, %15 : vector<8x384xf32>
    %17 = vector.extract_strided_slice %8 {offsets = [0, 384], sizes = [8, 384], strides = [1, 1]} : vector<8x768xbf16> to vector<8x384xbf16>
    %c0_12 = arith.constant 0 : index
    %c0_13 = arith.constant 0 : index
    %18 = vector.load %arg6[%c0_12, %c0_13] : memref<384x384xbf16, #tpu.memory_space<vmem>>, vector<384x384xbf16>
    %cst_14 = arith.constant dense<0.000000e+00> : vector<8x384xf32>
    %19 = tpu.matmul %17, %18, %cst_14 {dimension_numbers = #tpu.dot_dimension_numbers<[1], [0], [0], [1], [0, 0, 1, 1], [], []>} : vector<8x384xbf16>, vector<384x384xbf16>, vector<8x384xf32> -> vector<8x384xf32>
    %c0_15 = arith.constant 0 : index
    %c0_16 = arith.constant 0 : index
    %20 = vector.load %arg7[%c0_15, %c0_16] : memref<1x384xf32, #tpu.memory_space<vmem>>, vector<1x384xf32>
    %21 = vector.broadcast %20 : vector<1x384xf32> to vector<8x384xf32>
    %22 = arith.addf %19, %21 : vector<8x384xf32>
    %cst_17 = arith.constant 0.000000e+00 : f32
    %23 = vector.broadcast %cst_17 : f32 to vector<8x384xf32>
    %24 = arith.maximumf %22, %23 : vector<8x384xf32>
    %c0_18 = arith.constant 0 : index
    %c0_19 = arith.constant 0 : index
    %25 = vector.load %arg8[%c0_18, %c0_19] : memref<1x384xf32, #tpu.memory_space<vmem>>, vector<1x384xf32>
    %26 = vector.broadcast %25 : vector<1x384xf32> to vector<8x384xf32>
    %27 = arith.mulf %16, %26 : vector<8x384xf32>
    %cst_20 = arith.constant dense<0.000000e+00> : vector<8xf32>
    %28 = vector.multi_reduction <add>, %27, %cst_20 [1] : vector<8x384xf32> to vector<8xf32>
    %29 = vector.shape_cast %28 : vector<8xf32> to vector<8x1xf32>
    %c0_21 = arith.constant 0 : index
    %c0_22 = arith.constant 0 : index
    %30 = vector.load %arg9[%c0_21, %c0_22] : memref<1x384xf32, #tpu.memory_space<vmem>>, vector<1x384xf32>
    %31 = vector.broadcast %30 : vector<1x384xf32> to vector<8x384xf32>
    %32 = arith.mulf %24, %31 : vector<8x384xf32>
    %cst_23 = arith.constant dense<0.000000e+00> : vector<8xf32>
    %33 = vector.multi_reduction <add>, %32, %cst_23 [1] : vector<8x384xf32> to vector<8xf32>
    %34 = vector.shape_cast %33 : vector<8xf32> to vector<8x1xf32>
    %35 = tpu.concatenate %29, %34 in 1 : vector<8x1xf32>, vector<8x1xf32> -> vector<8x2xf32>
    %c0_24 = arith.constant 0 : index
    %c0_25 = arith.constant 0 : index
    %36 = vector.load %arg10[%c0_24, %c0_25] : memref<1x2xf32, #tpu.memory_space<vmem>>, vector<1x2xf32>
    %37 = vector.broadcast %36 : vector<1x2xf32> to vector<8x2xf32>
    %38 = arith.addf %35, %37 : vector<8x2xf32>
    %c0_26 = arith.constant 0 : index
    %c0_27 = arith.constant 0 : index
    %39 = vector.load %arg11[%c0_26, %c0_27] : memref<8x2xf32, #tpu.memory_space<vmem>>, vector<8x2xf32>
    tpu.vector_store %arg11[%c0_26, %c0_27], %38 {strides = array<i32>} : memref<8x2xf32, #tpu.memory_space<vmem>>, vector<8x2xf32>,
    return
  }
  func.func @transform_0(%arg0: i32) -> (i32, i32) {
    %c0_i32 = arith.constant 0 : i32
    %c0_i32_0 = arith.constant 0 : i32
    return %arg0, %c0_i32 : i32, i32
  }
  func.func @transform_1(%arg0: i32) -> (i32, i32) {
    %c0_i32 = arith.constant 0 : i32
    %c0_i32_0 = arith.constant 0 : i32
    %c0_i32_1 = arith.constant 0 : i32
    return %c0_i32, %c0_i32_0 : i32, i32
  }
  func.func @transform_2(%arg0: i32) -> (i32, i32) {
    %c0_i32 = arith.constant 0 : i32
    %c0_i32_0 = arith.constant 0 : i32
    %c0_i32_1 = arith.constant 0 : i32
    return %c0_i32, %c0_i32_0 : i32, i32
  }
  func.func @transform_3(%arg0: i32) -> (i32, i32) {
    %c0_i32 = arith.constant 0 : i32
    %c0_i32_0 = arith.constant 0 : i32
    %c0_i32_1 = arith.constant 0 : i32
    return %c0_i32, %c0_i32_0 : i32, i32
  }
  func.func @transform_4(%arg0: i32) -> (i32, i32) {
    %c0_i32 = arith.constant 0 : i32
    %c0_i32_0 = arith.constant 0 : i32
    %c0_i32_1 = arith.constant 0 : i32
    return %c0_i32, %c0_i32_0 : i32, i32
  }
  func.func @transform_5(%arg0: i32) -> (i32, i32) {
    %c0_i32 = arith.constant 0 : i32
    %c0_i32_0 = arith.constant 0 : i32
    %c0_i32_1 = arith.constant 0 : i32
    return %c0_i32, %c0_i32_0 : i32, i32
  }
  func.func @transform_6(%arg0: i32) -> (i32, i32) {
    %c0_i32 = arith.constant 0 : i32
    %c0_i32_0 = arith.constant 0 : i32
    %c0_i32_1 = arith.constant 0 : i32
    return %c0_i32, %c0_i32_0 : i32, i32
  }
  func.func @transform_7(%arg0: i32) -> (i32, i32) {
    %c0_i32 = arith.constant 0 : i32
    %c0_i32_0 = arith.constant 0 : i32
    %c0_i32_1 = arith.constant 0 : i32
    return %c0_i32, %c0_i32_0 : i32, i32
  }
  func.func @transform_8(%arg0: i32) -> (i32, i32) {
    %c0_i32 = arith.constant 0 : i32
    %c0_i32_0 = arith.constant 0 : i32
    %c0_i32_1 = arith.constant 0 : i32
    return %c0_i32, %c0_i32_0 : i32, i32
  }
  func.func @transform_9(%arg0: i32) -> (i32, i32) {
    %c0_i32 = arith.constant 0 : i32
    %c0_i32_0 = arith.constant 0 : i32
    %c0_i32_1 = arith.constant 0 : i32
    return %c0_i32, %c0_i32_0 : i32, i32
  }
  func.func @transform_10(%arg0: i32) -> (i32, i32) {
    %c0_i32 = arith.constant 0 : i32
    %c0_i32_0 = arith.constant 0 : i32
    return %arg0, %c0_i32 : i32, i32
  }
}

</mosaic_0001>

<llo_original>
// kernel: tpu_custom_call.1
$region0: #{tpu_custom_call.1}
  #allocation0 [shape = 'u32[]', space=smem, size = 0x4, offset = 0x4, fixed_abs, tag = 'smem constant byte address 0x4 - core index']
  #allocation1 [shape = 'u32[72,128]{1,0:T(1,128)}', space=vmem, size = 0x9000, scoped, tag = 'internal scratch']
  %s0 = inlined_call_operand.hbm [shape: f32[8,24], index: 0, kind: input, shape index: {}]
  %s1 = inlined_call_operand.hbm [shape: f32[24,768], index: 1, kind: input, shape index: {}]
  %s2 = inlined_call_operand.hbm [shape: f32[1,768], index: 2, kind: input, shape index: {}]
  %s3 = inlined_call_operand.hbm [shape: bf16[384,384], index: 3, kind: input, shape index: {}]
  %s4 = inlined_call_operand.vmem [shape: f32[1,384], index: 4, kind: input, shape index: {}]
  %s5 = inlined_call_operand.hbm [shape: bf16[384,384], index: 5, kind: input, shape index: {}]
  %s6 = inlined_call_operand.hbm [shape: f32[1,384], index: 6, kind: input, shape index: {}]
  %s7 = inlined_call_operand.vmem [shape: f32[1,384], index: 7, kind: input, shape index: {}]
  %s8 = inlined_call_operand.hbm [shape: f32[1,384], index: 8, kind: input, shape index: {}]
  %s9 = inlined_call_operand.vmem [shape: f32[1,2], index: 9, kind: input, shape index: {}]
  %s10 = inlined_call_operand.vmem [shape: f32[8,2], index: 10, kind: output, shape index: {}]
  %s11 = sld [smem:[#allocation0]]
  $region78: #{tpu_custom_call.1} parent=0
    _
  %s13 = ssub.s32 1, %s11
  %s14 = scalar_select 0, %s13, %s11
  $region1: #{tpu_custom_call.1} parent=0
    #allocation2 [shape = 'u8[4096]{0}', space=vmem, size = 0x1000, scoped, tag = 'input window, operand 0, single buffered']
    #allocation3 [shape = 's32[1]{0}', space=sflag, size = 0x4, scoped, tag = 'scoped memory for tpu_custom_call.1']
    #allocation4 [shape = 'u8[73728]{0}', space=vmem, size = 0x12000, scoped, tag = 'input window, operand 1, single buffered']
    #allocation5 [shape = 's32[1]{0}', space=sflag, size = 0x4, scoped, tag = 'scoped memory for tpu_custom_call.1']
    #allocation6 [shape = 'u8[3072]{0}', space=vmem, size = 0xc00, scoped, tag = 'input window, operand 2, single buffered']
    #allocation7 [shape = 'u8[294912]{0}', space=vmem, size = 0x48000, scoped, tag = 'input window, operand 3, single buffered']
    #allocation8 [shape = 's32[1]{0}', space=sflag, size = 0x4, scoped, tag = 'scoped memory for tpu_custom_call.1']
    #allocation9 [shape = 'u8[294912]{0}', space=vmem, size = 0x48000, scoped, tag = 'input window, operand 5, single buffered']
    #allocation10 [shape = 'u8[1536]{0}', space=vmem, size = 0x800, scoped, tag = 'input window, operand 6, single buffered']
    #allocation11 [shape = 's32[1]{0}', space=sflag, size = 0x4, scoped, tag = 'scoped memory for tpu_custom_call.1']
    #allocation12 [shape = 'u8[1536]{0}', space=vmem, size = 0x800, scoped, tag = 'input window, operand 8, single buffered']
    %15 = vsyncpa [#allocation3], 0
    %16 = vsyncpa [#allocation5], 0
    %17 = vsyncpa [#allocation8], 0
    %18 = vsyncpa [#allocation11], 0
    // Predicated region
    $region2: #{tpu_custom_call.1} parent=1 // pred_check
      _
    $region3: #{tpu_custom_call.1} parent=1 // pred_check_branch
      %20 = sbr.rel (0) target = $region5
    $region4: #{tpu_custom_call.1} parent=1 // pred_region
      %22 = vsyncadd [#allocation3], 0
      %s24 = sshll.u32 %s0, 4
      %s25 = int_to_ptr.hbm [resolvable:$true] %s24
      %s26 = sshll.u32 [#allocation2], 4
      %s27 = int_to_ptr.vmem [resolvable:$true] %s26
      %29 = dma.hbm_to_vmem [thread:$0]  %s25, 128, %s27, [#allocation3]
    $region5: #{tpu_custom_call.1} parent=1 // pred_fallthru
      _
    // Predicated region
    $region6: #{tpu_custom_call.1} parent=1 // pred_check
      _
    $region7: #{tpu_custom_call.1} parent=1 // pred_check_branch
      %31 = sbr.rel (0) target = $region9
    $region8: #{tpu_custom_call.1} parent=1 // pred_region
      %33 = vsyncadd [#allocation5], 0
      %s34 = sshll.u32 %s1, 4
      %s35 = int_to_ptr.hbm [resolvable:$true] %s34
      %s36 = sshll.u32 [#allocation4], 4
      %s37 = int_to_ptr.vmem [resolvable:$true] %s36
      %42 = dma.hbm_to_vmem [thread:$0]  %s35, 2304, %s37, [#allocation5], 768, 768, 48
    $region9: #{tpu_custom_call.1} parent=1 // pred_fallthru
      _
    // Predicated region
    $region10: #{tpu_custom_call.1} parent=1 // pred_check
      _
    $region11: #{tpu_custom_call.1} parent=1 // pred_check_branch
      %44 = sbr.rel (0) target = $region13
    $region12: #{tpu_custom_call.1} parent=1 // pred_region
      %46 = vsyncadd [#allocation5], 0
      %s48 = sshll.u32 %s2, 4
      %s49 = int_to_ptr.hbm [resolvable:$true] %s48
      %s50 = sshll.u32 [#allocation6], 4
      %s51 = int_to_ptr.vmem [resolvable:$true] %s50
      %53 = dma.hbm_to_vmem [thread:$0]  %s49, 96, %s51, [#allocation5]
    $region13: #{tpu_custom_call.1} parent=1 // pred_fallthru
      _
    // Predicated region
    $region14: #{tpu_custom_call.1} parent=1 // pred_check
      _
    $region15: #{tpu_custom_call.1} parent=1 // pred_check_branch
      %55 = sbr.rel (0) target = $region17
    $region16: #{tpu_custom_call.1} parent=1 // pred_region
      %57 = vsyncadd [#allocation8], 0
      %s58 = sshll.u32 %s3, 4
      %s59 = int_to_ptr.hbm [resolvable:$true] %s58
      %s60 = sshll.u32 [#allocation7], 4
      %s61 = int_to_ptr.vmem [resolvable:$true] %s60
      %66 = dma.hbm_to_vmem [thread:$0]  %s59, 9216, %s61, [#allocation8], 192, 192, 12
    $region17: #{tpu_custom_call.1} parent=1 // pred_fallthru
      _
    // Predicated region
    $region18: #{tpu_custom_call.1} parent=1 // pred_check
      _
    $region19: #{tpu_custom_call.1} parent=1 // pred_check_branch
      %68 = sbr.rel (0) target = $region21
    $region20: #{tpu_custom_call.1} parent=1 // pred_region
      _
    $region21: #{tpu_custom_call.1} parent=1 // pred_fallthru
      _
    // Predicated region
    $region22: #{tpu_custom_call.1} parent=1 // pred_check
      _
    $region23: #{tpu_custom_call.1} parent=1 // pred_check_branch
      %70 = sbr.rel (0) target = $region25
    $region24: #{tpu_custom_call.1} parent=1 // pred_region
      %72 = vsyncadd [#allocation8], 0
      %s73 = sshll.u32 %s5, 4
      %s74 = int_to_ptr.hbm [resolvable:$true] %s73
      %s75 = sshll.u32 [#allocation9], 4
      %s76 = int_to_ptr.vmem [resolvable:$true] %s75
      %81 = dma.hbm_to_vmem [thread:$0]  %s74, 9216, %s76, [#allocation8], 192, 192, 12
    $region25: #{tpu_custom_call.1} parent=1 // pred_fallthru
      _
    // Predicated region
    $region26: #{tpu_custom_call.1} parent=1 // pred_check
      _
    $region27: #{tpu_custom_call.1} parent=1 // pred_check_branch
      %83 = sbr.rel (0) target = $region29
    $region28: #{tpu_custom_call.1} parent=1 // pred_region
      %85 = vsyncadd [#allocation11], 0
      %s87 = sshll.u32 %s6, 4
      %s88 = int_to_ptr.hbm [resolvable:$true] %s87
      %s89 = sshll.u32 [#allocation10], 4
      %s90 = int_to_ptr.vmem [resolvable:$true] %s89
      %92 = dma.hbm_to_vmem [thread:$0]  %s88, 48, %s90, [#allocation11]
    $region29: #{tpu_custom_call.1} parent=1 // pred_fallthru
      _
    // Predicated region
    $region30: #{tpu_custom_call.1} parent=1 // pred_check
      _
    $region31: #{tpu_custom_call.1} parent=1 // pred_check_branch
      %94 = sbr.rel (0) target = $region33
    $region32: #{tpu_custom_call.1} parent=1 // pred_region
      _
    $region33: #{tpu_custom_call.1} parent=1 // pred_fallthru
      _
    // Predicated region
    $region34: #{tpu_custom_call.1} parent=1 // pred_check
      _
    $region35: #{tpu_custom_call.1} parent=1 // pred_check_branch
      %96 = sbr.rel (0) target = $region37
    $region36: #{tpu_custom_call.1} parent=1 // pred_region
      %98 = vsyncadd [#allocation11], 0
      %s100 = sshll.u32 %s8, 4
      %s101 = int_to_ptr.hbm [resolvable:$true] %s100
      %s102 = sshll.u32 [#allocation12], 4
      %s103 = int_to_ptr.vmem [resolvable:$true] %s102
      %105 = dma.hbm_to_vmem [thread:$0]  %s101, 48, %s103, [#allocation11]
    $region37: #{tpu_custom_call.1} parent=1 // pred_fallthru
      _
    // Predicated region
    $region38: #{tpu_custom_call.1} parent=1 // pred_check
      _
    $region39: #{tpu_custom_call.1} parent=1 // pred_check_branch
      %107 = sbr.rel (0) target = $region41
    $region40: #{tpu_custom_call.1} parent=1 // pred_region
      _
    $region41: #{tpu_custom_call.1} parent=1 // pred_fallthru
      _
    // Predicated region
    $region42: #{tpu_custom_call.1} parent=1 // pred_check
      _
    $region43: #{tpu_custom_call.1} parent=1 // pred_check_branch
      %109 = sbr.rel (0) target = $region45
    $region44: #{tpu_custom_call.1} parent=1 // pred_region
      %111 = dma.done [#allocation3], 128
    $region45: #{tpu_custom_call.1} parent=1 // pred_fallthru
      _
    // Predicated region
    $region46: #{tpu_custom_call.1} parent=1 // pred_check
      _
    $region47: #{tpu_custom_call.1} parent=1 // pred_check_branch
      %113 = sbr.rel (0) target = $region49
    $region48: #{tpu_custom_call.1} parent=1 // pred_region
      %115 = dma.done [#allocation5], 2304
    $region49: #{tpu_custom_call.1} parent=1 // pred_fallthru
      _
    // Predicated region
    $region50: #{tpu_custom_call.1} parent=1 // pred_check
      _
    $region51: #{tpu_custom_call.1} parent=1 // pred_check_branch
      %117 = sbr.rel (0) target = $region53
    $region52: #{tpu_custom_call.1} parent=1 // pred_region
      %119 = dma.done [#allocation5], 96
    $region53: #{tpu_custom_call.1} parent=1 // pred_fallthru
      _
    // Predicated region
    $region54: #{tpu_custom_call.1} parent=1 // pred_check
      _
    $region55: #{tpu_custom_call.1} parent=1 // pred_check_branch
      %121 = sbr.rel (0) target = $region57
    $region56: #{tpu_custom_call.1} parent=1 // pred_region
      %123 = dma.done [#allocation8], 9216
    $region57: #{tpu_custom_call.1} parent=1 // pred_fallthru
      _
    // Predicated region
    $region58: #{tpu_custom_call.1} parent=1 // pred_check
      _
    $region59: #{tpu_custom_call.1} parent=1 // pred_check_branch
      %125 = sbr.rel (0) target = $region61
    $region60: #{tpu_custom_call.1} parent=1 // pred_region
      %127 = dma.done [#allocation8], 9216
    $region61: #{tpu_custom_call.1} parent=1 // pred_fallthru
      _
    // Predicated region
    $region62: #{tpu_custom_call.1} parent=1 // pred_check
      _
    $region63: #{tpu_custom_call.1} parent=1 // pred_check_branch
      %129 = sbr.rel (0) target = $region65
    $region64: #{tpu_custom_call.1} parent=1 // pred_region
      %131 = dma.done [#allocation11], 48
    $region65: #{tpu_custom_call.1} parent=1 // pred_fallthru
      _
    // Predicated region
    $region66: #{tpu_custom_call.1} parent=1 // pred_check
      _
    $region67: #{tpu_custom_call.1} parent=1 // pred_check_branch
      %133 = sbr.rel (0) target = $region69
    $region68: #{tpu_custom_call.1} parent=1 // pred_region
      %135 = dma.done [#allocation11], 48
    $region69: #{tpu_custom_call.1} parent=1 // pred_fallthru
      _
    %v136 = vld [vmem:[#allocation2] sm:$0xff]
    %v137 = vld [vmem:[#allocation4] sm:$0xff]
    %v138 = vld [vmem:[#allocation4 + $0x8] sm:$0xff]
    %v139 = vld [vmem:[#allocation4 + $0x10] sm:$0xff]
    %v140 = vld [vmem:[#allocation4 + $0x18] sm:$0xff]
    %v141 = vld [vmem:[#allocation4 + $0x20] sm:$0xff]
    %v142 = vld [vmem:[#allocation4 + $0x28] sm:$0xff]
    %v143 = vld [vmem:[#allocation4 + $0x30] sm:$0xff]
    %v144 = vld [vmem:[#allocation4 + $0x38] sm:$0xff]
    %v145 = vld [vmem:[#allocation4 + $0x40] sm:$0xff]
    %v146 = vld [vmem:[#allocation4 + $0x48] sm:$0xff]
    %v147 = vld [vmem:[#allocation4 + $0x50] sm:$0xff]
    %v148 = vld [vmem:[#allocation4 + $0x58] sm:$0xff]
    %v149 = vld [vmem:[#allocation4 + $0x60] sm:$0xff]
    %v150 = vld [vmem:[#allocation4 + $0x68] sm:$0xff]
    %v151 = vld [vmem:[#allocation4 + $0x70] sm:$0xff]
    %v152 = vld [vmem:[#allocation4 + $0x78] sm:$0xff]
    %v153 = vld [vmem:[#allocation4 + $0x80] sm:$0xff]
    %v154 = vld [vmem:[#allocation4 + $0x88] sm:$0xff]
    %v155 = vld [vmem:[#allocation6] sm:$0x3f]
    %v157 = vperm.slane %v155, 0
    %v158 = vperm.slane %v155, 1
    %v159 = vperm.slane %v155, 2
    %v160 = vperm.slane %v155, 3
    %v161 = vperm.slane %v155, 4
    %v162 = vperm.slane %v155, 5
    %vm169 = vcmask 195584
    %v171 = vsel %vm169, %v136, 0
    %173 = vmatpush.msra.mxu0 0.0
    %174 = vmatpush.msra.mxu0 0.0
    %175 = vmatpush.msra.mxu0 0.0
    %176 = vmatpush.msra.mxu0 0.0
    %177 = vmatpush.msra.mxu0 0.0
    %178 = vmatpush.msra.mxu0 0.0
    %179 = vmatpush.msra.mxu0 0.0
    %180 = vmatpush.msra.mxu0 0.0
    %181 = vmatpush.msra.mxu0 0.0
    %182 = vmatpush.msra.mxu0 0.0
    %183 = vmatpush.msra.mxu0 0.0
    %184 = vmatpush.msra.mxu0 0.0
    %185 = vmatpush.msra.mxu0 0.0
    %186 = vmatpush.msra.mxu0 %v149
    %187 = vmatpush.msra.mxu0 %v143
    %188 = vmatpush.msra.mxu0 %v137
    %189 = vmatmul.f32.gmra.mxu0 %v171
    %v190 = vpop.f32.mrf.mxu0
    %v191 = vadd.f32 %v157, %v190
    %192 = vdwg.mxu0
    %193 = vmatpush.msra.mxu0 0.0
    %194 = vmatpush.msra.mxu0 0.0
    %195 = vmatpush.msra.mxu0 0.0
    %196 = vmatpush.msra.mxu0 0.0
    %197 = vmatpush.msra.mxu0 0.0
    %198 = vmatpush.msra.mxu0 0.0
    %199 = vmatpush.msra.mxu0 0.0
    %200 = vmatpush.msra.mxu0 0.0
    %201 = vmatpush.msra.mxu0 0.0
    %202 = vmatpush.msra.mxu0 0.0
    %203 = vmatpush.msra.mxu0 0.0
    %204 = vmatpush.msra.mxu0 0.0
    %205 = vmatpush.msra.mxu0 0.0
    %206 = vmatpush.msra.mxu0 %v150
    %207 = vmatpush.msra.mxu0 %v144
    %208 = vmatpush.msra.mxu0 %v138
    %209 = vmatmul.f32.gmra.mxu0 %v171
    %v210 = vpop.f32.mrf.mxu0
    %v211 = vadd.f32 %v158, %v210
    %212 = vdwg.mxu0
    %213 = vmatpush.msra.mxu0 0.0
    %214 = vmatpush.msra.mxu0 0.0
    %215 = vmatpush.msra.mxu0 0.0
    %216 = vmatpush.msra.mxu0 0.0
    %217 = vmatpush.msra.mxu0 0.0
    %218 = vmatpush.msra.mxu0 0.0
    %219 = vmatpush.msra.mxu0 0.0
    %220 = vmatpush.msra.mxu0 0.0
    %221 = vmatpush.msra.mxu0 0.0
    %222 = vmatpush.msra.mxu0 0.0
    %223 = vmatpush.msra.mxu0 0.0
    %224 = vmatpush.msra.mxu0 0.0
    %225 = vmatpush.msra.mxu0 0.0
    %226 = vmatpush.msra.mxu0 %v151
    %227 = vmatpush.msra.mxu0 %v145
    %228 = vmatpush.msra.mxu0 %v139
    %229 = vmatmul.f32.gmra.mxu0 %v171
    %v230 = vpop.f32.mrf.mxu0
    %v231 = vadd.f32 %v159, %v230
    %232 = vdwg.mxu0
    %233 = vmatpush.msra.mxu0 0.0
    %234 = vmatpush.msra.mxu0 0.0
    %235 = vmatpush.msra.mxu0 0.0
    %236 = vmatpush.msra.mxu0 0.0
    %237 = vmatpush.msra.mxu0 0.0
    %238 = vmatpush.msra.mxu0 0.0
    %239 = vmatpush.msra.mxu0 0.0
    %240 = vmatpush.msra.mxu0 0.0
    %241 = vmatpush.msra.mxu0 0.0
    %242 = vmatpush.msra.mxu0 0.0
    %243 = vmatpush.msra.mxu0 0.0
    %244 = vmatpush.msra.mxu0 0.0
    %245 = vmatpush.msra.mxu0 0.0
    %246 = vmatpush.msra.mxu0 %v152
    %247 = vmatpush.msra.mxu0 %v146
    %248 = vmatpush.msra.mxu0 %v140
    %249 = vmatmul.f32.gmra.mxu0 %v171
    %v250 = vpop.f32.mrf.mxu0
    %v251 = vadd.f32 %v160, %v250
    %252 = vdwg.mxu0
    %253 = vmatpush.msra.mxu0 0.0
    %254 = vmatpush.msra.mxu0 0.0
    %255 = vmatpush.msra.mxu0 0.0
    %256 = vmatpush.msra.mxu0 0.0
    %257 = vmatpush.msra.mxu0 0.0
    %258 = vmatpush.msra.mxu0 0.0
    %259 = vmatpush.msra.mxu0 0.0
    %260 = vmatpush.msra.mxu0 0.0
    %261 = vmatpush.msra.mxu0 0.0
    %262 = vmatpush.msra.mxu0 0.0
    %263 = vmatpush.msra.mxu0 0.0
    %264 = vmatpush.msra.mxu0 0.0
    %265 = vmatpush.msra.mxu0 0.0
    %266 = vmatpush.msra.mxu0 %v153
    %267 = vmatpush.msra.mxu0 %v147
    %268 = vmatpush.msra.mxu0 %v141
    %269 = vmatmul.f32.gmra.mxu0 %v171
    %v270 = vpop.f32.mrf.mxu0
    %v271 = vadd.f32 %v161, %v270
    %272 = vdwg.mxu0
    %273 = vmatpush.msra.mxu0 0.0
    %274 = vmatpush.msra.mxu0 0.0
    %275 = vmatpush.msra.mxu0 0.0
    %276 = vmatpush.msra.mxu0 0.0
    %277 = vmatpush.msra.mxu0 0.0
    %278 = vmatpush.msra.mxu0 0.0
    %279 = vmatpush.msra.mxu0 0.0
    %280 = vmatpush.msra.mxu0 0.0
    %281 = vmatpush.msra.mxu0 0.0
    %282 = vmatpush.msra.mxu0 0.0
    %283 = vmatpush.msra.mxu0 0.0
    %284 = vmatpush.msra.mxu0 0.0
    %285 = vmatpush.msra.mxu0 0.0
    %286 = vmatpush.msra.mxu0 %v154
    %287 = vmatpush.msra.mxu0 %v148
    %288 = vmatpush.msra.mxu0 %v142
    %289 = vmatmul.f32.gmra.mxu0 %v171
    %v290 = vpop.f32.mrf.mxu0
    %v291 = vadd.f32 %v162, %v290
    %292 = vdwg.mxu0
    %v293 = vmax.f32 %v191, 0.0
    %v294 = vmax.f32 %v211, 0.0
    %v295 = vmax.f32 %v231, 0.0
    %v296 = vmax.f32 %v251, 0.0
    %v297 = vmax.f32 %v271, 0.0
    %v298 = vmax.f32 %v291, 0.0
    %v299 = vpack.c.bf16 %v294, %v293
    %v300 = vpack.c.bf16 %v296, %v295
    %v301 = vpack.c.bf16 %v298, %v297
    %v302 = vld [vmem:[#allocation7] sm:$0xff]
    %v303 = vld [vmem:[#allocation7 + $0x8] sm:$0xf]
    %v304 = vld [vmem:[#allocation7 + $0xc] sm:$0xff]
    %v305 = vld [vmem:[#allocation7 + $0x14] sm:$0xf]
    %v306 = vld [vmem:[#allocation7 + $0x18] sm:$0xff]
    %v307 = vld [vmem:[#allocation7 + $0x20] sm:$0xf]
    %v308 = vld [vmem:[#allocation7 + $0x24] sm:$0xff]
    %v309 = vld [vmem:[#allocation7 + $0x2c] sm:$0xf]
    %v310 = vld [vmem:[#allocation7 + $0x30] sm:$0xff]
    %v311 = vld [vmem:[#allocation7 + $0x38] sm:$0xf]
    %v312 = vld [vmem:[#allocation7 + $0x3c] sm:$0xff]
    %v313 = vld [vmem:[#allocation7 + $0x44] sm:$0xf]
    %v314 = vld [vmem:[#allocation7 + $0x48] sm:$0xff]
    %v315 = vld [vmem:[#allocation7 + $0x50] sm:$0xf]
    %v316 = vld [vmem:[#allocation7 + $0x54] sm:$0xff]
    %v317 = vld [vmem:[#allocation7 + $0x5c] sm:$0xf]
    %v318 = vld [vmem:[#allocation7 + $0x60] sm:$0xff]
    %v319 = vld [vmem:[#allocation7 + $0x68] sm:$0xf]
    %v320 = vld [vmem:[#allocation7 + $0x6c] sm:$0xff]
    %v321 = vld [vmem:[#allocation7 + $0x74] sm:$0xf]
    %v322 = vld [vmem:[#allocation7 + $0x78] sm:$0xff]
    %v323 = vld [vmem:[#allocation7 + $0x80] sm:$0xf]
    %v324 = vld [vmem:[#allocation7 + $0x84] sm:$0xff]
    %v325 = vld [vmem:[#allocation7 + $0x8c] sm:$0xf]
    %v326 = vld [vmem:[#allocation7 + $0x90] sm:$0xff]
    %v327 = vld [vmem:[#allocation7 + $0x98] sm:$0xf]
    %v328 = vld [vmem:[#allocation7 + $0x9c] sm:$0xff]
    %v329 = vld [vmem:[#allocation7 + $0xa4] sm:$0xf]
    %v330 = vld [vmem:[#allocation7 + $0xa8] sm:$0xff]
    %v331 = vld [vmem:[#allocation7 + $0xb0] sm:$0xf]
    %v332 = vld [vmem:[#allocation7 + $0xb4] sm:$0xff]
    %v333 = vld [vmem:[#allocation7 + $0xbc] sm:$0xf]
    %v334 = vld [vmem:[#allocation7 + $0xc0] sm:$0xff]
    %v335 = vld [vmem:[#allocation7 + $0xc8] sm:$0xf]
    %v336 = vld [vmem:[#allocation7 + $0xcc] sm:$0xff]
    %v337 = vld [vmem:[#allocation7 + $0xd4] sm:$0xf]
    %v338 = vld [vmem:[#allocation7 + $0xd8] sm:$0xff]
    %v339 = vld [vmem:[#allocation7 + $0xe0] sm:$0xf]
    %v340 = vld [vmem:[#allocation7 + $0xe4] sm:$0xff]
    %v341 = vld [vmem:[#allocation7 + $0xec] sm:$0xf]
    %v342 = vld [vmem:[#allocation7 + $0xf0] sm:$0xff]
    %v343 = vld [vmem:[#allocation7 + $0xf8] sm:$0xf]
    %v344 = vld [vmem:[#allocation7 + $0xfc] sm:$0xff]
    %v345 = vld [vmem:[#allocation7 + $0x104] sm:$0xf]
    %v346 = vld [vmem:[#allocation7 + $0x108] sm:$0xff]
    %v347 = vld [vmem:[#allocation7 + $0x110] sm:$0xf]
    %v348 = vld [vmem:[#allocation7 + $0x114] sm:$0xff]
    %v349 = vld [vmem:[#allocation7 + $0x11c] sm:$0xf]
    %v350 = vld [vmem:[#allocation7 + $0x120] sm:$0xff]
    %v351 = vld [vmem:[#allocation7 + $0x128] sm:$0xf]
    %v352 = vld [vmem:[#allocation7 + $0x12c] sm:$0xff]
    %v353 = vld [vmem:[#allocation7 + $0x134] sm:$0xf]
    %v354 = vld [vmem:[#allocation7 + $0x138] sm:$0xff]
    %v355 = vld [vmem:[#allocation7 + $0x140] sm:$0xf]
    %v356 = vld [vmem:[#allocation7 + $0x144] sm:$0xff]
    %v357 = vld [vmem:[#allocation7 + $0x14c] sm:$0xf]
    %v358 = vld [vmem:[#allocation7 + $0x150] sm:$0xff]
    %v359 = vld [vmem:[#allocation7 + $0x158] sm:$0xf]
    %v360 = vld [vmem:[#allocation7 + $0x15c] sm:$0xff]
    %v361 = vld [vmem:[#allocation7 + $0x164] sm:$0xf]
    %v362 = vld [vmem:[#allocation7 + $0x168] sm:$0xff]
    %v363 = vld [vmem:[#allocation7 + $0x170] sm:$0xf]
    %v364 = vld [vmem:[#allocation7 + $0x174] sm:$0xff]
    %v365 = vld [vmem:[#allocation7 + $0x17c] sm:$0xf]
    %v366 = vld [vmem:[#allocation7 + $0x180] sm:$0xff]
    %v367 = vld [vmem:[#allocation7 + $0x188] sm:$0xf]
    %v368 = vld [vmem:[#allocation7 + $0x18c] sm:$0xff]
    %v369 = vld [vmem:[#allocation7 + $0x194] sm:$0xf]
    %v370 = vld [vmem:[#allocation7 + $0x198] sm:$0xff]
    %v371 = vld [vmem:[#allocation7 + $0x1a0] sm:$0xf]
    %v372 = vld [vmem:[#allocation7 + $0x1a4] sm:$0xff]
    %v373 = vld [vmem:[#allocation7 + $0x1ac] sm:$0xf]
    %v374 = vld [vmem:[#allocation7 + $0x1b0] sm:$0xff]
    %v375 = vld [vmem:[#allocation7 + $0x1b8] sm:$0xf]
    %v376 = vld [vmem:[#allocation7 + $0x1bc] sm:$0xff]
    %v377 = vld [vmem:[#allocation7 + $0x1c4] sm:$0xf]
    %v378 = vld [vmem:[#allocation7 + $0x1c8] sm:$0xff]
    %v379 = vld [vmem:[#allocation7 + $0x1d0] sm:$0xf]
    %v380 = vld [vmem:[#allocation7 + $0x1d4] sm:$0xff]
    %v381 = vld [vmem:[#allocation7 + $0x1dc] sm:$0xf]
    %v382 = vld [vmem:[#allocation7 + $0x1e0] sm:$0xff]
    %v383 = vld [vmem:[#allocation7 + $0x1e8] sm:$0xf]
    %v384 = vld [vmem:[#allocation7 + $0x1ec] sm:$0xff]
    %v385 = vld [vmem:[#allocation7 + $0x1f4] sm:$0xf]
    %v386 = vld [vmem:[#allocation7 + $0x1f8] sm:$0xff]
    %v387 = vld [vmem:[#allocation7 + $0x200] sm:$0xf]
    %v388 = vld [vmem:[#allocation7 + $0x204] sm:$0xff]
    %v389 = vld [vmem:[#allocation7 + $0x20c] sm:$0xf]
    %v390 = vld [vmem:[#allocation7 + $0x210] sm:$0xff]
    %v391 = vld [vmem:[#allocation7 + $0x218] sm:$0xf]
    %v392 = vld [vmem:[#allocation7 + $0x21c] sm:$0xff]
    %v393 = vld [vmem:[#allocation7 + $0x224] sm:$0xf]
    %v394 = vld [vmem:[#allocation7 + $0x228] sm:$0xff]
    %v395 = vld [vmem:[#allocation7 + $0x230] sm:$0xf]
    %v396 = vld [vmem:[#allocation7 + $0x234] sm:$0xff]
    %v397 = vld [vmem:[#allocation7 + $0x23c] sm:$0xf]
    %v398 = vld [vmem:[%s4] sm:$0x7]
    %v400 = vperm.slane %v398, 0
    %v401 = vperm.slane %v398, 1
    %v402 = vperm.slane %v398, 2
    %v408 = vunpack.c.l.b16 %v299
    %v409 = vunpack.c.h.b16 %v299
    %v410 = vunpack.c.l.b16 %v300
    %v411 = vpack.c.b16 %v408, %v408
    %v412 = vpack.c.b16 %v409, %v409
    %v413 = vpack.c.b16 %v410, %v410
    %v513 = vunpack.c.l.b16 %v302
    %v514 = vunpack.c.h.b16 %v302
    %v515 = vunpack.c.l.b16 %v303
    %v516 = vunpack.c.l.b16 %v304
    %v517 = vunpack.c.h.b16 %v304
    %v518 = vunpack.c.l.b16 %v305
    %v519 = vunpack.c.l.b16 %v306
    %v520 = vunpack.c.h.b16 %v306
    %v521 = vunpack.c.l.b16 %v307
    %v522 = vunpack.c.l.b16 %v308
    %v523 = vunpack.c.h.b16 %v308
    %v524 = vunpack.c.l.b16 %v309
    %v525 = vunpack.c.l.b16 %v310
    %v526 = vunpack.c.h.b16 %v310
    %v527 = vunpack.c.l.b16 %v311
    %v528 = vunpack.c.l.b16 %v312
    %v529 = vunpack.c.h.b16 %v312
    %v530 = vunpack.c.l.b16 %v313
    %v531 = vunpack.c.l.b16 %v314
    %v532 = vunpack.c.h.b16 %v314
    %v533 = vunpack.c.l.b16 %v315
    %v534 = vunpack.c.l.b16 %v316
    %v535 = vunpack.c.h.b16 %v316
    %v536 = vunpack.c.l.b16 %v317
    %v537 = vunpack.c.l.b16 %v318
    %v538 = vunpack.c.h.b16 %v318
    %v539 = vunpack.c.l.b16 %v319
    %v540 = vunpack.c.l.b16 %v320
    %v541 = vunpack.c.h.b16 %v320
    %v542 = vunpack.c.l.b16 %v321
    %v543 = vunpack.c.l.b16 %v322
    %v544 = vunpack.c.h.b16 %v322
    %v545 = vunpack.c.l.b16 %v323
    %v546 = vunpack.c.l.b16 %v324
    %v547 = vunpack.c.h.b16 %v324
    %v548 = vunpack.c.l.b16 %v325
    %v549 = vunpack.c.l.b16 %v326
    %v550 = vunpack.c.h.b16 %v326
    %v551 = vunpack.c.l.b16 %v327
    %v552 = vunpack.c.l.b16 %v328
    %v553 = vunpack.c.h.b16 %v328
    %v554 = vunpack.c.l.b16 %v329
    %v555 = vunpack.c.l.b16 %v330
    %v556 = vunpack.c.h.b16 %v330
    %v557 = vunpack.c.l.b16 %v331
    %v558 = vunpack.c.l.b16 %v332
    %v559 = vunpack.c.h.b16 %v332
    %v560 = vunpack.c.l.b16 %v333
    %v561 = vunpack.c.l.b16 %v334
    %v562 = vunpack.c.h.b16 %v334
    %v563 = vunpack.c.l.b16 %v335
    %v564 = vunpack.c.l.b16 %v336
    %v565 = vunpack.c.h.b16 %v336
    %v566 = vunpack.c.l.b16 %v337
    %v567 = vunpack.c.l.b16 %v338
    %v568 = vunpack.c.h.b16 %v338
    %v569 = vunpack.c.l.b16 %v339
    %v570 = vunpack.c.l.b16 %v340
    %v571 = vunpack.c.h.b16 %v340
    %v572 = vunpack.c.l.b16 %v341
    %v573 = vunpack.c.l.b16 %v342
    %v574 = vunpack.c.h.b16 %v342
    %v575 = vunpack.c.l.b16 %v343
    %v576 = vunpack.c.l.b16 %v344
    %v577 = vunpack.c.h.b16 %v344
    %v578 = vunpack.c.l.b16 %v345
    %v579 = vunpack.c.l.b16 %v346
    %v580 = vunpack.c.h.b16 %v346
    %v581 = vunpack.c.l.b16 %v347
    %v582 = vunpack.c.l.b16 %v348
    %v583 = vunpack.c.h.b16 %v348
    %v584 = vunpack.c.l.b16 %v349
    %v585 = vunpack.c.l.b16 %v350
    %v586 = vunpack.c.h.b16 %v350
    %v587 = vunpack.c.l.b16 %v351
    %v588 = vunpack.c.l.b16 %v352
    %v589 = vunpack.c.h.b16 %v352
    %v590 = vunpack.c.l.b16 %v353
    %v591 = vunpack.c.l.b16 %v354
    %v592 = vunpack.c.h.b16 %v354
    %v593 = vunpack.c.l.b16 %v355
    %v594 = vunpack.c.l.b16 %v356
    %v595 = vunpack.c.h.b16 %v356
    %v596 = vunpack.c.l.b16 %v357
    %v597 = vunpack.c.l.b16 %v358
    %v598 = vunpack.c.h.b16 %v358
    %v599 = vunpack.c.l.b16 %v359
    %v600 = vunpack.c.l.b16 %v360
    %v601 = vunpack.c.h.b16 %v360
    %v602 = vunpack.c.l.b16 %v361
    %v603 = vunpack.c.l.b16 %v362
    %v604 = vunpack.c.h.b16 %v362
    %v605 = vunpack.c.l.b16 %v363
    %v606 = vunpack.c.l.b16 %v364
    %v607 = vunpack.c.h.b16 %v364
    %v608 = vunpack.c.l.b16 %v365
    %v609 = vunpack.c.l.b16 %v366
    %v610 = vunpack.c.h.b16 %v366
    %v611 = vunpack.c.l.b16 %v367
    %v612 = vunpack.c.l.b16 %v368
    %v613 = vunpack.c.h.b16 %v368
    %v614 = vunpack.c.l.b16 %v369
    %v615 = vunpack.c.l.b16 %v370
    %v616 = vunpack.c.h.b16 %v370
    %v617 = vunpack.c.l.b16 %v371
    %v618 = vunpack.c.l.b16 %v372
    %v619 = vunpack.c.h.b16 %v372
    %v620 = vunpack.c.l.b16 %v373
    %v621 = vunpack.c.l.b16 %v374
    %v622 = vunpack.c.h.b16 %v374
    %v623 = vunpack.c.l.b16 %v375
    %v624 = vunpack.c.l.b16 %v376
    %v625 = vunpack.c.h.b16 %v376
    %v626 = vunpack.c.l.b16 %v377
    %v627 = vunpack.c.l.b16 %v378
    %v628 = vunpack.c.h.b16 %v378
    %v629 = vunpack.c.l.b16 %v379
    %v630 = vunpack.c.l.b16 %v380
    %v631 = vunpack.c.h.b16 %v380
    %v632 = vunpack.c.l.b16 %v381
    %v633 = vunpack.c.l.b16 %v382
    %v634 = vunpack.c.h.b16 %v382
    %v635 = vunpack.c.l.b16 %v383
    %v636 = vunpack.c.l.b16 %v384
    %v637 = vunpack.c.h.b16 %v384
    %v638 = vunpack.c.l.b16 %v385
    %v639 = vunpack.c.l.b16 %v386
    %v640 = vunpack.c.h.b16 %v386
    %v641 = vunpack.c.l.b16 %v387
    %v642 = vunpack.c.l.b16 %v388
    %v643 = vunpack.c.h.b16 %v388
    %v644 = vunpack.c.l.b16 %v389
    %v645 = vunpack.c.l.b16 %v390
    %v646 = vunpack.c.h.b16 %v390
    %v647 = vunpack.c.l.b16 %v391
    %v648 = vunpack.c.l.b16 %v392
    %v649 = vunpack.c.h.b16 %v392
    %v650 = vunpack.c.l.b16 %v393
    %v651 = vunpack.c.l.b16 %v394
    %v652 = vunpack.c.h.b16 %v394
    %v653 = vunpack.c.l.b16 %v395
    %v654 = vunpack.c.l.b16 %v396
    %v655 = vunpack.c.h.b16 %v396
    %v656 = vunpack.c.l.b16 %v397
    %v657 = vpack.c.b16 %v516, %v513
    %v658 = vpack.c.b16 %v517, %v514
    %v659 = vpack.c.b16 %v518, %v515
    %v660 = vpack.c.b16 %v522, %v519
    %v661 = vpack.c.b16 %v523, %v520
    %v662 = vpack.c.b16 %v524, %v521
    %v663 = vpack.c.b16 %v528, %v525
    %v664 = vpack.c.b16 %v529, %v526
    %v665 = vpack.c.b16 %v530, %v527
    %v666 = vpack.c.b16 %v534, %v531
    %v667 = vpack.c.b16 %v535, %v532
    %v668 = vpack.c.b16 %v536, %v533
    %v669 = vpack.c.b16 %v540, %v537
    %v670 = vpack.c.b16 %v541, %v538
    %v671 = vpack.c.b16 %v542, %v539
    %v672 = vpack.c.b16 %v546, %v543
    %v673 = vpack.c.b16 %v547, %v544
    %v674 = vpack.c.b16 %v548, %v545
    %v675 = vpack.c.b16 %v552, %v549
    %v676 = vpack.c.b16 %v553, %v550
    %v677 = vpack.c.b16 %v554, %v551
    %v678 = vpack.c.b16 %v558, %v555
    %v679 = vpack.c.b16 %v559, %v556
    %v680 = vpack.c.b16 %v560, %v557
    %v681 = vpack.c.b16 %v564, %v561
    %v682 = vpack.c.b16 %v565, %v562
    %v683 = vpack.c.b16 %v566, %v563
    %v684 = vpack.c.b16 %v570, %v567
    %v685 = vpack.c.b16 %v571, %v568
    %v686 = vpack.c.b16 %v572, %v569
    %v687 = vpack.c.b16 %v576, %v573
    %v688 = vpack.c.b16 %v577, %v574
    %v689 = vpack.c.b16 %v578, %v575
    %v690 = vpack.c.b16 %v582, %v579
    %v691 = vpack.c.b16 %v583, %v580
    %v692 = vpack.c.b16 %v584, %v581
    %v693 = vpack.c.b16 %v588, %v585
    %v694 = vpack.c.b16 %v589, %v586
    %v695 = vpack.c.b16 %v590, %v587
    %v696 = vpack.c.b16 %v594, %v591
    %v697 = vpack.c.b16 %v595, %v592
    %v698 = vpack.c.b16 %v596, %v593
    %v699 = vpack.c.b16 %v600, %v597
    %v700 = vpack.c.b16 %v601, %v598
    %v701 = vpack.c.b16 %v602, %v599
    %v702 = vpack.c.b16 %v606, %v603
    %v703 = vpack.c.b16 %v607, %v604
    %v704 = vpack.c.b16 %v608, %v605
    %v705 = vpack.c.b16 %v612, %v609
    %v706 = vpack.c.b16 %v613, %v610
    %v707 = vpack.c.b16 %v614, %v611
    %v708 = vpack.c.b16 %v618, %v615
    %v709 = vpack.c.b16 %v619, %v616
    %v710 = vpack.c.b16 %v620, %v617
    %v711 = vpack.c.b16 %v624, %v621
    %v712 = vpack.c.b16 %v625, %v622
    %v713 = vpack.c.b16 %v626, %v623
    %v714 = vpack.c.b16 %v630, %v627
    %v715 = vpack.c.b16 %v631, %v628
    %v716 = vpack.c.b16 %v632, %v629
    %v717 = vpack.c.b16 %v636, %v633
    %v718 = vpack.c.b16 %v637, %v634
    %v719 = vpack.c.b16 %v638, %v635
    %v720 = vpack.c.b16 %v642, %v639
    %v721 = vpack.c.b16 %v643, %v640
    %v722 = vpack.c.b16 %v644, %v641
    %v723 = vpack.c.b16 %v648, %v645
    %v724 = vpack.c.b16 %v649, %v646
    %v725 = vpack.c.b16 %v650, %v647
    %v726 = vpack.c.b16 %v654, %v651
    %v727 = vpack.c.b16 %v655, %v652
    %v728 = vpack.c.b16 %v656, %v653
    %801 = vmatpush.bf16.msra.mxu0 %v678
    %802 = vmatpush.bf16.msra.mxu0 %v675
    %803 = vmatpush.bf16.msra.mxu0 %v672
    %804 = vmatpush.bf16.msra.mxu0 %v669
    %805 = vmatpush.bf16.msra.mxu0 %v666
    %806 = vmatpush.bf16.msra.mxu0 %v663
    %807 = vmatpush.bf16.msra.mxu0 %v660
    %808 = vmatpush.bf16.msra.mxu0 %v657
    %809 = vmatmul.bf16.gmra.mxu0 %v411
    %v810 = vpop.f32.mrf.mxu0
    %v811 = vadd.f32 %v400, %v810
    %v812 = vpop.f32.mrf.mxu0
    %813 = vdwg.mxu0
    %814 = vmatpush.bf16.msra.mxu0 %v702
    %815 = vmatpush.bf16.msra.mxu0 %v699
    %816 = vmatpush.bf16.msra.mxu0 %v696
    %817 = vmatpush.bf16.msra.mxu0 %v693
    %818 = vmatpush.bf16.msra.mxu0 %v690
    %819 = vmatpush.bf16.msra.mxu0 %v687
    %820 = vmatpush.bf16.msra.mxu0 %v684
    %821 = vmatpush.bf16.msra.mxu0 %v681
    %822 = vmatmul.bf16.gmra.mxu0 %v412
    %v823 = vpop.f32.mrf.mxu0
    %v824 = vadd.f32 %v811, %v823
    %v825 = vpop.f32.mrf.mxu0
    %826 = vdwg.mxu0
    %827 = vmatpush.bf16.msra.mxu0 %v726
    %828 = vmatpush.bf16.msra.mxu0 %v723
    %829 = vmatpush.bf16.msra.mxu0 %v720
    %830 = vmatpush.bf16.msra.mxu0 %v717
    %831 = vmatpush.bf16.msra.mxu0 %v714
    %832 = vmatpush.bf16.msra.mxu0 %v711
    %833 = vmatpush.bf16.msra.mxu0 %v708
    %834 = vmatpush.bf16.msra.mxu0 %v705
    %835 = vmatmul.bf16.gmra.mxu0 %v413
    %v836 = vpop.f32.mrf.mxu0
    %v837 = vadd.f32 %v824, %v836
    %v838 = vpop.f32.mrf.mxu0
    %839 = vdwg.mxu0
    %840 = vmatpush.bf16.msra.mxu0 %v679
    %841 = vmatpush.bf16.msra.mxu0 %v676
    %842 = vmatpush.bf16.msra.mxu0 %v673
    %843 = vmatpush.bf16.msra.mxu0 %v670
    %844 = vmatpush.bf16.msra.mxu0 %v667
    %845 = vmatpush.bf16.msra.mxu0 %v664
    %846 = vmatpush.bf16.msra.mxu0 %v661
    %847 = vmatpush.bf16.msra.mxu0 %v658
    %848 = vmatmul.bf16.gmra.mxu0 %v411
    %v849 = vpop.f32.mrf.mxu0
    %v850 = vadd.f32 %v401, %v849
    %v851 = vpop.f32.mrf.mxu0
    %852 = vdwg.mxu0
    %853 = vmatpush.bf16.msra.mxu0 %v703
    %854 = vmatpush.bf16.msra.mxu0 %v700
    %855 = vmatpush.bf16.msra.mxu0 %v697
    %856 = vmatpush.bf16.msra.mxu0 %v694
    %857 = vmatpush.bf16.msra.mxu0 %v691
    %858 = vmatpush.bf16.msra.mxu0 %v688
    %859 = vmatpush.bf16.msra.mxu0 %v685
    %860 = vmatpush.bf16.msra.mxu0 %v682
    %861 = vmatmul.bf16.gmra.mxu0 %v412
    %v862 = vpop.f32.mrf.mxu0
    %v863 = vadd.f32 %v850, %v862
    %v864 = vpop.f32.mrf.mxu0
    %865 = vdwg.mxu0
    %866 = vmatpush.bf16.msra.mxu0 %v727
    %867 = vmatpush.bf16.msra.mxu0 %v724
    %868 = vmatpush.bf16.msra.mxu0 %v721
    %869 = vmatpush.bf16.msra.mxu0 %v718
    %870 = vmatpush.bf16.msra.mxu0 %v715
    %871 = vmatpush.bf16.msra.mxu0 %v712
    %872 = vmatpush.bf16.msra.mxu0 %v709
    %873 = vmatpush.bf16.msra.mxu0 %v706
    %874 = vmatmul.bf16.gmra.mxu0 %v413
    %v875 = vpop.f32.mrf.mxu0
    %v876 = vadd.f32 %v863, %v875
    %v877 = vpop.f32.mrf.mxu0
    %878 = vdwg.mxu0
    %879 = vmatpush.bf16.msra.mxu0 %v680
    %880 = vmatpush.bf16.msra.mxu0 %v677
    %881 = vmatpush.bf16.msra.mxu0 %v674
    %882 = vmatpush.bf16.msra.mxu0 %v671
    %883 = vmatpush.bf16.msra.mxu0 %v668
    %884 = vmatpush.bf16.msra.mxu0 %v665
    %885 = vmatpush.bf16.msra.mxu0 %v662
    %886 = vmatpush.bf16.msra.mxu0 %v659
    %887 = vmatmul.bf16.gmra.mxu0 %v411
    %v888 = vpop.f32.mrf.mxu0
    %v889 = vadd.f32 %v402, %v888
    %v890 = vpop.f32.mrf.mxu0
    %891 = vdwg.mxu0
    %892 = vmatpush.bf16.msra.mxu0 %v704
    %893 = vmatpush.bf16.msra.mxu0 %v701
    %894 = vmatpush.bf16.msra.mxu0 %v698
    %895 = vmatpush.bf16.msra.mxu0 %v695
    %896 = vmatpush.bf16.msra.mxu0 %v692
    %897 = vmatpush.bf16.msra.mxu0 %v689
    %898 = vmatpush.bf16.msra.mxu0 %v686
    %899 = vmatpush.bf16.msra.mxu0 %v683
    %900 = vmatmul.bf16.gmra.mxu0 %v412
    %v901 = vpop.f32.mrf.mxu0
    %v902 = vadd.f32 %v889, %v901
    %v903 = vpop.f32.mrf.mxu0
    %904 = vdwg.mxu0
    %905 = vmatpush.bf16.msra.mxu0 %v728
    %906 = vmatpush.bf16.msra.mxu0 %v725
    %907 = vmatpush.bf16.msra.mxu0 %v722
    %908 = vmatpush.bf16.msra.mxu0 %v719
    %909 = vmatpush.bf16.msra.mxu0 %v716
    %910 = vmatpush.bf16.msra.mxu0 %v713
    %911 = vmatpush.bf16.msra.mxu0 %v710
    %912 = vmatpush.bf16.msra.mxu0 %v707
    %913 = vmatmul.bf16.gmra.mxu0 %v413
    %v914 = vpop.f32.mrf.mxu0
    %v915 = vadd.f32 %v902, %v914
    %v916 = vpop.f32.mrf.mxu0
    %917 = vdwg.mxu0
    %v918 = vmax.f32 %v837, 0.0
    %v919 = vmax.f32 %v876, 0.0
    %v920 = vmax.f32 %v915, 0.0
    %v921 = vld [vmem:[#allocation9] sm:$0xff]
    %v922 = vld [vmem:[#allocation9 + $0x8] sm:$0xf]
    %v923 = vld [vmem:[#allocation9 + $0xc] sm:$0xff]
    %v924 = vld [vmem:[#allocation9 + $0x14] sm:$0xf]
    %v925 = vld [vmem:[#allocation9 + $0x18] sm:$0xff]
    %v926 = vld [vmem:[#allocation9 + $0x20] sm:$0xf]
    %v927 = vld [vmem:[#allocation9 + $0x24] sm:$0xff]
    %v928 = vld [vmem:[#allocation9 + $0x2c] sm:$0xf]
    %v929 = vld [vmem:[#allocation9 + $0x30] sm:$0xff]
    %v930 = vld [vmem:[#allocation9 + $0x38] sm:$0xf]
    %v931 = vld [vmem:[#allocation9 + $0x3c] sm:$0xff]
    %v932 = vld [vmem:[#allocation9 + $0x44] sm:$0xf]
    %v933 = vld [vmem:[#allocation9 + $0x48] sm:$0xff]
    %v934 = vld [vmem:[#allocation9 + $0x50] sm:$0xf]
    %v935 = vld [vmem:[#allocation9 + $0x54] sm:$0xff]
    %v936 = vld [vmem:[#allocation9 + $0x5c] sm:$0xf]
    %v937 = vld [vmem:[#allocation9 + $0x60] sm:$0xff]
    %v938 = vld [vmem:[#allocation9 + $0x68] sm:$0xf]
    %v939 = vld [vmem:[#allocation9 + $0x6c] sm:$0xff]
    %v940 = vld [vmem:[#allocation9 + $0x74] sm:$0xf]
    %v941 = vld [vmem:[#allocation9 + $0x78] sm:$0xff]
    %v942 = vld [vmem:[#allocation9 + $0x80] sm:$0xf]
    %v943 = vld [vmem:[#allocation9 + $0x84] sm:$0xff]
    %v944 = vld [vmem:[#allocation9 + $0x8c] sm:$0xf]
    %v945 = vld [vmem:[#allocation9 + $0x90] sm:$0xff]
    %v946 = vld [vmem:[#allocation9 + $0x98] sm:$0xf]
    %v947 = vld [vmem:[#allocation9 + $0x9c] sm:$0xff]
    %v948 = vld [vmem:[#allocation9 + $0xa4] sm:$0xf]
    %v949 = vld [vmem:[#allocation9 + $0xa8] sm:$0xff]
    %v950 = vld [vmem:[#allocation9 + $0xb0] sm:$0xf]
    %v951 = vld [vmem:[#allocation9 + $0xb4] sm:$0xff]
    %v952 = vld [vmem:[#allocation9 + $0xbc] sm:$0xf]
    %v953 = vld [vmem:[#allocation9 + $0xc0] sm:$0xff]
    %v954 = vld [vmem:[#allocation9 + $0xc8] sm:$0xf]
    %v955 = vld [vmem:[#allocation9 + $0xcc] sm:$0xff]
    %v956 = vld [vmem:[#allocation9 + $0xd4] sm:$0xf]
    %v957 = vld [vmem:[#allocation9 + $0xd8] sm:$0xff]
    %v958 = vld [vmem:[#allocation9 + $0xe0] sm:$0xf]
    %v959 = vld [vmem:[#allocation9 + $0xe4] sm:$0xff]
    %v960 = vld [vmem:[#allocation9 + $0xec] sm:$0xf]
    %v961 = vld [vmem:[#allocation9 + $0xf0] sm:$0xff]
    %v962 = vld [vmem:[#allocation9 + $0xf8] sm:$0xf]
    %v963 = vld [vmem:[#allocation9 + $0xfc] sm:$0xff]
    %v964 = vld [vmem:[#allocation9 + $0x104] sm:$0xf]
    %v965 = vld [vmem:[#allocation9 + $0x108] sm:$0xff]
    %v966 = vld [vmem:[#allocation9 + $0x110] sm:$0xf]
    %v967 = vld [vmem:[#allocation9 + $0x114] sm:$0xff]
    %v968 = vld [vmem:[#allocation9 + $0x11c] sm:$0xf]
    %v969 = vld [vmem:[#allocation9 + $0x120] sm:$0xff]
    %v970 = vld [vmem:[#allocation9 + $0x128] sm:$0xf]
    %v971 = vld [vmem:[#allocation9 + $0x12c] sm:$0xff]
    %v972 = vld [vmem:[#allocation9 + $0x134] sm:$0xf]
    %v973 = vld [vmem:[#allocation9 + $0x138] sm:$0xff]
    %v974 = vld [vmem:[#allocation9 + $0x140] sm:$0xf]
    %v975 = vld [vmem:[#allocation9 + $0x144] sm:$0xff]
    %v976 = vld [vmem:[#allocation9 + $0x14c] sm:$0xf]
    %v977 = vld [vmem:[#allocation9 + $0x150] sm:$0xff]
    %v978 = vld [vmem:[#allocation9 + $0x158] sm:$0xf]
    %v979 = vld [vmem:[#allocation9 + $0x15c] sm:$0xff]
    %v980 = vld [vmem:[#allocation9 + $0x164] sm:$0xf]
    %v981 = vld [vmem:[#allocation9 + $0x168] sm:$0xff]
    %v982 = vld [vmem:[#allocation9 + $0x170] sm:$0xf]
    %v983 = vld [vmem:[#allocation9 + $0x174] sm:$0xff]
    %v984 = vld [vmem:[#allocation9 + $0x17c] sm:$0xf]
    %v985 = vld [vmem:[#allocation9 + $0x180] sm:$0xff]
    %v986 = vld [vmem:[#allocation9 + $0x188] sm:$0xf]
    %v987 = vld [vmem:[#allocation9 + $0x18c] sm:$0xff]
    %v988 = vld [vmem:[#allocation9 + $0x194] sm:$0xf]
    %v989 = vld [vmem:[#allocation9 + $0x198] sm:$0xff]
    %v990 = vld [vmem:[#allocation9 + $0x1a0] sm:$0xf]
    %v991 = vld [vmem:[#allocation9 + $0x1a4] sm:$0xff]
    %v992 = vld [vmem:[#allocation9 + $0x1ac] sm:$0xf]
    %v993 = vld [vmem:[#allocation9 + $0x1b0] sm:$0xff]
    %v994 = vld [vmem:[#allocation9 + $0x1b8] sm:$0xf]
    %v995 = vld [vmem:[#allocation9 + $0x1bc] sm:$0xff]
    %v996 = vld [vmem:[#allocation9 + $0x1c4] sm:$0xf]
    %v997 = vld [vmem:[#allocation9 + $0x1c8] sm:$0xff]
    %v998 = vld [vmem:[#allocation9 + $0x1d0] sm:$0xf]
    %v999 = vld [vmem:[#allocation9 + $0x1d4] sm:$0xff]
    %v1000 = vld [vmem:[#allocation9 + $0x1dc] sm:$0xf]
    %v1001 = vld [vmem:[#allocation9 + $0x1e0] sm:$0xff]
    %v1002 = vld [vmem:[#allocation9 + $0x1e8] sm:$0xf]
    %v1003 = vld [vmem:[#allocation9 + $0x1ec] sm:$0xff]
    %v1004 = vld [vmem:[#allocation9 + $0x1f4] sm:$0xf]
    %v1005 = vld [vmem:[#allocation9 + $0x1f8] sm:$0xff]
    %v1006 = vld [vmem:[#allocation9 + $0x200] sm:$0xf]
    %v1007 = vld [vmem:[#allocation9 + $0x204] sm:$0xff]
    %v1008 = vld [vmem:[#allocation9 + $0x20c] sm:$0xf]
    %v1009 = vld [vmem:[#allocation9 + $0x210] sm:$0xff]
    %v1010 = vld [vmem:[#allocation9 + $0x218] sm:$0xf]
    %v1011 = vld [vmem:[#allocation9 + $0x21c] sm:$0xff]
    %v1012 = vld [vmem:[#allocation9 + $0x224] sm:$0xf]
    %v1013 = vld [vmem:[#allocation9 + $0x228] sm:$0xff]
    %v1014 = vld [vmem:[#allocation9 + $0x230] sm:$0xf]
    %v1015 = vld [vmem:[#allocation9 + $0x234] sm:$0xff]
    %v1016 = vld [vmem:[#allocation9 + $0x23c] sm:$0xf]
    %v1017 = vld [vmem:[#allocation10] sm:$0x7]
    %v1019 = vperm.slane %v1017, 0
    %v1020 = vperm.slane %v1017, 1
    %v1021 = vperm.slane %v1017, 2
    %v1026 = vunpack.c.h.b16 %v300
    %v1027 = vunpack.c.l.b16 %v301
    %v1028 = vunpack.c.h.b16 %v301
    %v1029 = vpack.c.b16 %v1026, %v1026
    %v1030 = vpack.c.b16 %v1027, %v1027
    %v1031 = vpack.c.b16 %v1028, %v1028
    %v1131 = vunpack.c.l.b16 %v921
    %v1132 = vunpack.c.h.b16 %v921
    %v1133 = vunpack.c.l.b16 %v922
    %v1134 = vunpack.c.l.b16 %v923
    %v1135 = vunpack.c.h.b16 %v923
    %v1136 = vunpack.c.l.b16 %v924
    %v1137 = vunpack.c.l.b16 %v925
    %v1138 = vunpack.c.h.b16 %v925
    %v1139 = vunpack.c.l.b16 %v926
    %v1140 = vunpack.c.l.b16 %v927
    %v1141 = vunpack.c.h.b16 %v927
    %v1142 = vunpack.c.l.b16 %v928
    %v1143 = vunpack.c.l.b16 %v929
    %v1144 = vunpack.c.h.b16 %v929
    %v1145 = vunpack.c.l.b16 %v930
    %v1146 = vunpack.c.l.b16 %v931
    %v1147 = vunpack.c.h.b16 %v931
    %v1148 = vunpack.c.l.b16 %v932
    %v1149 = vunpack.c.l.b16 %v933
    %v1150 = vunpack.c.h.b16 %v933
    %v1151 = vunpack.c.l.b16 %v934
    %v1152 = vunpack.c.l.b16 %v935
    %v1153 = vunpack.c.h.b16 %v935
    %v1154 = vunpack.c.l.b16 %v936
    %v1155 = vunpack.c.l.b16 %v937
    %v1156 = vunpack.c.h.b16 %v937
    %v1157 = vunpack.c.l.b16 %v938
    %v1158 = vunpack.c.l.b16 %v939
    %v1159 = vunpack.c.h.b16 %v939
    %v1160 = vunpack.c.l.b16 %v940
    %v1161 = vunpack.c.l.b16 %v941
    %v1162 = vunpack.c.h.b16 %v941
    %v1163 = vunpack.c.l.b16 %v942
    %v1164 = vunpack.c.l.b16 %v943
    %v1165 = vunpack.c.h.b16 %v943
    %v1166 = vunpack.c.l.b16 %v944
    %v1167 = vunpack.c.l.b16 %v945
    %v1168 = vunpack.c.h.b16 %v945
    %v1169 = vunpack.c.l.b16 %v946
    %v1170 = vunpack.c.l.b16 %v947
    %v1171 = vunpack.c.h.b16 %v947
    %v1172 = vunpack.c.l.b16 %v948
    %v1173 = vunpack.c.l.b16 %v949
    %v1174 = vunpack.c.h.b16 %v949
    %v1175 = vunpack.c.l.b16 %v950
    %v1176 = vunpack.c.l.b16 %v951
    %v1177 = vunpack.c.h.b16 %v951
    %v1178 = vunpack.c.l.b16 %v952
    %v1179 = vunpack.c.l.b16 %v953
    %v1180 = vunpack.c.h.b16 %v953
    %v1181 = vunpack.c.l.b16 %v954
    %v1182 = vunpack.c.l.b16 %v955
    %v1183 = vunpack.c.h.b16 %v955
    %v1184 = vunpack.c.l.b16 %v956
    %v1185 = vunpack.c.l.b16 %v957
    %v1186 = vunpack.c.h.b16 %v957
    %v1187 = vunpack.c.l.b16 %v958
    %v1188 = vunpack.c.l.b16 %v959
    %v1189 = vunpack.c.h.b16 %v959
    %v1190 = vunpack.c.l.b16 %v960
    %v1191 = vunpack.c.l.b16 %v961
    %v1192 = vunpack.c.h.b16 %v961
    %v1193 = vunpack.c.l.b16 %v962
    %v1194 = vunpack.c.l.b16 %v963
    %v1195 = vunpack.c.h.b16 %v963
    %v1196 = vunpack.c.l.b16 %v964
    %v1197 = vunpack.c.l.b16 %v965
    %v1198 = vunpack.c.h.b16 %v965
    %v1199 = vunpack.c.l.b16 %v966
    %v1200 = vunpack.c.l.b16 %v967
    %v1201 = vunpack.c.h.b16 %v967
    %v1202 = vunpack.c.l.b16 %v968
    %v1203 = vunpack.c.l.b16 %v969
    %v1204 = vunpack.c.h.b16 %v969
    %v1205 = vunpack.c.l.b16 %v970
    %v1206 = vunpack.c.l.b16 %v971
    %v1207 = vunpack.c.h.b16 %v971
    %v1208 = vunpack.c.l.b16 %v972
    %v1209 = vunpack.c.l.b16 %v973
    %v1210 = vunpack.c.h.b16 %v973
    %v1211 = vunpack.c.l.b16 %v974
    %v1212 = vunpack.c.l.b16 %v975
    %v1213 = vunpack.c.h.b16 %v975
    %v1214 = vunpack.c.l.b16 %v976
    %v1215 = vunpack.c.l.b16 %v977
    %v1216 = vunpack.c.h.b16 %v977
    %v1217 = vunpack.c.l.b16 %v978
    %v1218 = vunpack.c.l.b16 %v979
    %v1219 = vunpack.c.h.b16 %v979
    %v1220 = vunpack.c.l.b16 %v980
    %v1221 = vunpack.c.l.b16 %v981
    %v1222 = vunpack.c.h.b16 %v981
    %v1223 = vunpack.c.l.b16 %v982
    %v1224 = vunpack.c.l.b16 %v983
    %v1225 = vunpack.c.h.b16 %v983
    %v1226 = vunpack.c.l.b16 %v984
    %v1227 = vunpack.c.l.b16 %v985
    %v1228 = vunpack.c.h.b16 %v985
    %v1229 = vunpack.c.l.b16 %v986
    %v1230 = vunpack.c.l.b16 %v987
    %v1231 = vunpack.c.h.b16 %v987
    %v1232 = vunpack.c.l.b16 %v988
    %v1233 = vunpack.c.l.b16 %v989
    %v1234 = vunpack.c.h.b16 %v989
    %v1235 = vunpack.c.l.b16 %v990
    %v1236 = vunpack.c.l.b16 %v991
    %v1237 = vunpack.c.h.b16 %v991
    %v1238 = vunpack.c.l.b16 %v992
    %v1239 = vunpack.c.l.b16 %v993
    %v1240 = vunpack.c.h.b16 %v993
    %v1241 = vunpack.c.l.b16 %v994
    %v1242 = vunpack.c.l.b16 %v995
    %v1243 = vunpack.c.h.b16 %v995
    %v1244 = vunpack.c.l.b16 %v996
    %v1245 = vunpack.c.l.b16 %v997
    %v1246 = vunpack.c.h.b16 %v997
    %v1247 = vunpack.c.l.b16 %v998
    %v1248 = vunpack.c.l.b16 %v999
    %v1249 = vunpack.c.h.b16 %v999
    %v1250 = vunpack.c.l.b16 %v1000
    %v1251 = vunpack.c.l.b16 %v1001
    %v1252 = vunpack.c.h.b16 %v1001
    %v1253 = vunpack.c.l.b16 %v1002
    %v1254 = vunpack.c.l.b16 %v1003
    %v1255 = vunpack.c.h.b16 %v1003
    %v1256 = vunpack.c.l.b16 %v1004
    %v1257 = vunpack.c.l.b16 %v1005
    %v1258 = vunpack.c.h.b16 %v1005
    %v1259 = vunpack.c.l.b16 %v1006
    %v1260 = vunpack.c.l.b16 %v1007
    %v1261 = vunpack.c.h.b16 %v1007
    %v1262 = vunpack.c.l.b16 %v1008
    %v1263 = vunpack.c.l.b16 %v1009
    %v1264 = vunpack.c.h.b16 %v1009
    %v1265 = vunpack.c.l.b16 %v1010
    %v1266 = vunpack.c.l.b16 %v1011
    %v1267 = vunpack.c.h.b16 %v1011
    %v1268 = vunpack.c.l.b16 %v1012
    %v1269 = vunpack.c.l.b16 %v1013
    %v1270 = vunpack.c.h.b16 %v1013
    %v1271 = vunpack.c.l.b16 %v1014
    %v1272 = vunpack.c.l.b16 %v1015
    %v1273 = vunpack.c.h.b16 %v1015
    %v1274 = vunpack.c.l.b16 %v1016
    %v1275 = vpack.c.b16 %v1134, %v1131
    %v1276 = vpack.c.b16 %v1135, %v1132
    %v1277 = vpack.c.b16 %v1136, %v1133
    %v1278 = vpack.c.b16 %v1140, %v1137
    %v1279 = vpack.c.b16 %v1141, %v1138
    %v1280 = vpack.c.b16 %v1142, %v1139
    %v1281 = vpack.c.b16 %v1146, %v1143
    %v1282 = vpack.c.b16 %v1147, %v1144
    %v1283 = vpack.c.b16 %v1148, %v1145
    %v1284 = vpack.c.b16 %v1152, %v1149
    %v1285 = vpack.c.b16 %v1153, %v1150
    %v1286 = vpack.c.b16 %v1154, %v1151
    %v1287 = vpack.c.b16 %v1158, %v1155
    %v1288 = vpack.c.b16 %v1159, %v1156
    %v1289 = vpack.c.b16 %v1160, %v1157
    %v1290 = vpack.c.b16 %v1164, %v1161
    %v1291 = vpack.c.b16 %v1165, %v1162
    %v1292 = vpack.c.b16 %v1166, %v1163
    %v1293 = vpack.c.b16 %v1170, %v1167
    %v1294 = vpack.c.b16 %v1171, %v1168
    %v1295 = vpack.c.b16 %v1172, %v1169
    %v1296 = vpack.c.b16 %v1176, %v1173
    %v1297 = vpack.c.b16 %v1177, %v1174
    %v1298 = vpack.c.b16 %v1178, %v1175
    %v1299 = vpack.c.b16 %v1182, %v1179
    %v1300 = vpack.c.b16 %v1183, %v1180
    %v1301 = vpack.c.b16 %v1184, %v1181
    %v1302 = vpack.c.b16 %v1188, %v1185
    %v1303 = vpack.c.b16 %v1189, %v1186
    %v1304 = vpack.c.b16 %v1190, %v1187
    %v1305 = vpack.c.b16 %v1194, %v1191
    %v1306 = vpack.c.b16 %v1195, %v1192
    %v1307 = vpack.c.b16 %v1196, %v1193
    %v1308 = vpack.c.b16 %v1200, %v1197
    %v1309 = vpack.c.b16 %v1201, %v1198
    %v1310 = vpack.c.b16 %v1202, %v1199
    %v1311 = vpack.c.b16 %v1206, %v1203
    %v1312 = vpack.c.b16 %v1207, %v1204
    %v1313 = vpack.c.b16 %v1208, %v1205
    %v1314 = vpack.c.b16 %v1212, %v1209
    %v1315 = vpack.c.b16 %v1213, %v1210
    %v1316 = vpack.c.b16 %v1214, %v1211
    %v1317 = vpack.c.b16 %v1218, %v1215
    %v1318 = vpack.c.b16 %v1219, %v1216
    %v1319 = vpack.c.b16 %v1220, %v1217
    %v1320 = vpack.c.b16 %v1224, %v1221
    %v1321 = vpack.c.b16 %v1225, %v1222
    %v1322 = vpack.c.b16 %v1226, %v1223
    %v1323 = vpack.c.b16 %v1230, %v1227
    %v1324 = vpack.c.b16 %v1231, %v1228
    %v1325 = vpack.c.b16 %v1232, %v1229
    %v1326 = vpack.c.b16 %v1236, %v1233
    %v1327 = vpack.c.b16 %v1237, %v1234
    %v1328 = vpack.c.b16 %v1238, %v1235
    %v1329 = vpack.c.b16 %v1242, %v1239
    %v1330 = vpack.c.b16 %v1243, %v1240
    %v1331 = vpack.c.b16 %v1244, %v1241
    %v1332 = vpack.c.b16 %v1248, %v1245
    %v1333 = vpack.c.b16 %v1249, %v1246
    %v1334 = vpack.c.b16 %v1250, %v1247
    %v1335 = vpack.c.b16 %v1254, %v1251
    %v1336 = vpack.c.b16 %v1255, %v1252
    %v1337 = vpack.c.b16 %v1256, %v1253
    %v1338 = vpack.c.b16 %v1260, %v1257
    %v1339 = vpack.c.b16 %v1261, %v1258
    %v1340 = vpack.c.b16 %v1262, %v1259
    %v1341 = vpack.c.b16 %v1266, %v1263
    %v1342 = vpack.c.b16 %v1267, %v1264
    %v1343 = vpack.c.b16 %v1268, %v1265
    %v1344 = vpack.c.b16 %v1272, %v1269
    %v1345 = vpack.c.b16 %v1273, %v1270
    %v1346 = vpack.c.b16 %v1274, %v1271
    %1419 = vmatpush.bf16.msra.mxu0 %v1296
    %1420 = vmatpush.bf16.msra.mxu0 %v1293
    %1421 = vmatpush.bf16.msra.mxu0 %v1290
    %1422 = vmatpush.bf16.msra.mxu0 %v1287
    %1423 = vmatpush.bf16.msra.mxu0 %v1284
    %1424 = vmatpush.bf16.msra.mxu0 %v1281
    %1425 = vmatpush.bf16.msra.mxu0 %v1278
    %1426 = vmatpush.bf16.msra.mxu0 %v1275
    %1427 = vmatmul.bf16.gmra.mxu0 %v1029
    %v1428 = vpop.f32.mrf.mxu0
    %v1429 = vadd.f32 %v1019, %v1428
    %v1430 = vpop.f32.mrf.mxu0
    %1431 = vdwg.mxu0
    %1432 = vmatpush.bf16.msra.mxu0 %v1320
    %1433 = vmatpush.bf16.msra.mxu0 %v1317
    %1434 = vmatpush.bf16.msra.mxu0 %v1314
    %1435 = vmatpush.bf16.msra.mxu0 %v1311
    %1436 = vmatpush.bf16.msra.mxu0 %v1308
    %1437 = vmatpush.bf16.msra.mxu0 %v1305
    %1438 = vmatpush.bf16.msra.mxu0 %v1302
    %1439 = vmatpush.bf16.msra.mxu0 %v1299
    %1440 = vmatmul.bf16.gmra.mxu0 %v1030
    %v1441 = vpop.f32.mrf.mxu0
    %v1442 = vadd.f32 %v1429, %v1441
    %v1443 = vpop.f32.mrf.mxu0
    %1444 = vdwg.mxu0
    %1445 = vmatpush.bf16.msra.mxu0 %v1344
    %1446 = vmatpush.bf16.msra.mxu0 %v1341
    %1447 = vmatpush.bf16.msra.mxu0 %v1338
    %1448 = vmatpush.bf16.msra.mxu0 %v1335
    %1449 = vmatpush.bf16.msra.mxu0 %v1332
    %1450 = vmatpush.bf16.msra.mxu0 %v1329
    %1451 = vmatpush.bf16.msra.mxu0 %v1326
    %1452 = vmatpush.bf16.msra.mxu0 %v1323
    %1453 = vmatmul.bf16.gmra.mxu0 %v1031
    %v1454 = vpop.f32.mrf.mxu0
    %v1455 = vadd.f32 %v1442, %v1454
    %v1456 = vpop.f32.mrf.mxu0
    %1457 = vdwg.mxu0
    %1458 = vmatpush.bf16.msra.mxu0 %v1297
    %1459 = vmatpush.bf16.msra.mxu0 %v1294
    %1460 = vmatpush.bf16.msra.mxu0 %v1291
    %1461 = vmatpush.bf16.msra.mxu0 %v1288
    %1462 = vmatpush.bf16.msra.mxu0 %v1285
    %1463 = vmatpush.bf16.msra.mxu0 %v1282
    %1464 = vmatpush.bf16.msra.mxu0 %v1279
    %1465 = vmatpush.bf16.msra.mxu0 %v1276
    %1466 = vmatmul.bf16.gmra.mxu0 %v1029
    %v1467 = vpop.f32.mrf.mxu0
    %v1468 = vadd.f32 %v1020, %v1467
    %v1469 = vpop.f32.mrf.mxu0
    %1470 = vdwg.mxu0
    %1471 = vmatpush.bf16.msra.mxu0 %v1321
    %1472 = vmatpush.bf16.msra.mxu0 %v1318
    %1473 = vmatpush.bf16.msra.mxu0 %v1315
    %1474 = vmatpush.bf16.msra.mxu0 %v1312
    %1475 = vmatpush.bf16.msra.mxu0 %v1309
    %1476 = vmatpush.bf16.msra.mxu0 %v1306
    %1477 = vmatpush.bf16.msra.mxu0 %v1303
    %1478 = vmatpush.bf16.msra.mxu0 %v1300
    %1479 = vmatmul.bf16.gmra.mxu0 %v1030
    %v1480 = vpop.f32.mrf.mxu0
    %v1481 = vadd.f32 %v1468, %v1480
    %v1482 = vpop.f32.mrf.mxu0
    %1483 = vdwg.mxu0
    %1484 = vmatpush.bf16.msra.mxu0 %v1345
    %1485 = vmatpush.bf16.msra.mxu0 %v1342
    %1486 = vmatpush.bf16.msra.mxu0 %v1339
    %1487 = vmatpush.bf16.msra.mxu0 %v1336
    %1488 = vmatpush.bf16.msra.mxu0 %v1333
    %1489 = vmatpush.bf16.msra.mxu0 %v1330
    %1490 = vmatpush.bf16.msra.mxu0 %v1327
    %1491 = vmatpush.bf16.msra.mxu0 %v1324
    %1492 = vmatmul.bf16.gmra.mxu0 %v1031
    %v1493 = vpop.f32.mrf.mxu0
    %v1494 = vadd.f32 %v1481, %v1493
    %v1495 = vpop.f32.mrf.mxu0
    %1496 = vdwg.mxu0
    %1497 = vmatpush.bf16.msra.mxu0 %v1298
    %1498 = vmatpush.bf16.msra.mxu0 %v1295
    %1499 = vmatpush.bf16.msra.mxu0 %v1292
    %1500 = vmatpush.bf16.msra.mxu0 %v1289
    %1501 = vmatpush.bf16.msra.mxu0 %v1286
    %1502 = vmatpush.bf16.msra.mxu0 %v1283
    %1503 = vmatpush.bf16.msra.mxu0 %v1280
    %1504 = vmatpush.bf16.msra.mxu0 %v1277
    %1505 = vmatmul.bf16.gmra.mxu0 %v1029
    %v1506 = vpop.f32.mrf.mxu0
    %v1507 = vadd.f32 %v1021, %v1506
    %v1508 = vpop.f32.mrf.mxu0
    %1509 = vdwg.mxu0
    %1510 = vmatpush.bf16.msra.mxu0 %v1322
    %1511 = vmatpush.bf16.msra.mxu0 %v1319
    %1512 = vmatpush.bf16.msra.mxu0 %v1316
    %1513 = vmatpush.bf16.msra.mxu0 %v1313
    %1514 = vmatpush.bf16.msra.mxu0 %v1310
    %1515 = vmatpush.bf16.msra.mxu0 %v1307
    %1516 = vmatpush.bf16.msra.mxu0 %v1304
    %1517 = vmatpush.bf16.msra.mxu0 %v1301
    %1518 = vmatmul.bf16.gmra.mxu0 %v1030
    %v1519 = vpop.f32.mrf.mxu0
    %v1520 = vadd.f32 %v1507, %v1519
    %v1521 = vpop.f32.mrf.mxu0
    %1522 = vdwg.mxu0
    %1523 = vmatpush.bf16.msra.mxu0 %v1346
    %1524 = vmatpush.bf16.msra.mxu0 %v1343
    %1525 = vmatpush.bf16.msra.mxu0 %v1340
    %1526 = vmatpush.bf16.msra.mxu0 %v1337
    %1527 = vmatpush.bf16.msra.mxu0 %v1334
    %1528 = vmatpush.bf16.msra.mxu0 %v1331
    %1529 = vmatpush.bf16.msra.mxu0 %v1328
    %1530 = vmatpush.bf16.msra.mxu0 %v1325
    %1531 = vmatmul.bf16.gmra.mxu0 %v1031
    %v1532 = vpop.f32.mrf.mxu0
    %v1533 = vadd.f32 %v1520, %v1532
    %v1534 = vpop.f32.mrf.mxu0
    %1535 = vdwg.mxu0
    %v1536 = vmax.f32 %v1455, 0.0
    %v1537 = vmax.f32 %v1494, 0.0
    %v1538 = vmax.f32 %v1533, 0.0
    %v1539 = vld [vmem:[%s7] sm:$0x7]
    %v1541 = vperm.slane %v1539, 0
    %v1542 = vperm.slane %v1539, 1
    %v1543 = vperm.slane %v1539, 2
    %v1547 = vmul.f32 %v918, %v1541
    %v1548 = vmul.f32 %v919, %v1542
    %v1549 = vmul.f32 %v920, %v1543
    %v1550 = vadd.f32 %v1547, %v1548
    %v1551 = vadd.f32 %v1550, %v1549
    %1552 = vadd.xlane.f32.xlu0 %v1551
    %v1553 = vpop.xlane.xlu0 %1552
    %v1554 = vld [vmem:[#allocation12] sm:$0x7]
    %v1556 = vperm.slane %v1554, 0
    %v1557 = vperm.slane %v1554, 1
    %v1558 = vperm.slane %v1554, 2
    %v1562 = vmul.f32 %v1536, %v1556
    %v1563 = vmul.f32 %v1537, %v1557
    %v1564 = vmul.f32 %v1538, %v1558
    %v1565 = vadd.f32 %v1562, %v1563
    %v1566 = vadd.f32 %v1565, %v1564
    %1567 = vadd.xlane.f32.xlu0 %v1566
    %v1568 = vpop.xlane.xlu0 %1567
    %vm1569 = vcmask 7168
    %v1570 = vsel %vm1569, %v1553, %v1568
    %v1571 = vld [vmem:[%s9] sm:$0x1]
    %v1573 = vperm.slane %v1571, 0
    %v1575 = vadd.f32 %v1570, %v1573
    %vm1576 = vcmask 15360
    %1577 = vst.msk [vmem:[%s10] sm:$0xff] %vm1576, %v1575
    // Predicated region
    $region70: #{tpu_custom_call.1} parent=1 // pred_check
      _
    $region71: #{tpu_custom_call.1} parent=1 // pred_check_branch
      %1579 = sbr.rel (0) target = $region73
    $region72: #{tpu_custom_call.1} parent=1 // pred_region
      _
    $region73: #{tpu_custom_call.1} parent=1 // pred_fallthru
      _
    // Predicated region
    $region74: #{tpu_custom_call.1} parent=1 // pred_check
      _
    $region75: #{tpu_custom_call.1} parent=1 // pred_check_branch
      %1581 = sbr.rel (0) target = $region77
    $region76: #{tpu_custom_call.1} parent=1 // pred_region
      _
    $region77: #{tpu_custom_call.1} parent=1 // pred_fallthru
      _
    %1582 = vsyncpa [#allocation3], 1
    %1583 = vsyncpa [#allocation5], 1
    %1584 = vsyncpa [#allocation8], 1
    %1585 = vsyncpa [#allocation11], 1

</llo_original>
